<compile_context>
chip_gen: v5e
topology: v5e:2x2
jax: 0.10.0
libtpu: 0.0.40
codegen_flags: <defaults>
</compile_context>

<pallas_src>
import functools

import jax
import jax.numpy as jnp
from jax import lax
from jax.experimental import pallas as pl
from jax.experimental.pallas import tpu as pltpu


def _round_up(n, m):
    return ((n + m - 1) // m) * m


def _snn_kernel(x_ref, w1_ref, b1_ref, w2_ref, b2_ref,
                spk_out_ref, mem_out_ref,
                mem1_ref, mem2_ref, *, beta, threshold, matmul_dtype):
    t_blk = pl.program_id(1)

    # Reset membrane state at the start of each batch tile's time sweep.
    @pl.when(t_blk == 0)
    def _():
        mem1_ref[...] = jnp.zeros_like(mem1_ref)
        mem2_ref[...] = jnp.zeros_like(mem2_ref)

    w1 = w1_ref[...].astype(matmul_dtype)   # (I, H)
    w2 = w2_ref[...].astype(matmul_dtype)   # (H, O)
    b1 = b1_ref[...]                        # (1, H) f32
    b2 = b2_ref[...]                        # (1, O) f32

    tt_steps = x_ref.shape[1]               # TT, static

    def step(tt, carry):
        mem1, mem2 = carry
        x_t = x_ref[:, tt, :].astype(matmul_dtype)          # (TB, I)

        # ---- layer 1: fc1 + Leaky ----
        cur1 = jnp.dot(x_t, w1, preferred_element_type=jnp.float32) + b1
        dec1 = beta * mem1 + cur1
        mem1 = jnp.where(mem1 > threshold, dec1 - threshold, dec1)
        spk1 = jnp.where(mem1 > threshold, 1.0, 0.0)

        # ---- layer 2: fc2 + Leaky ----
        cur2 = jnp.dot(spk1.astype(matmul_dtype), w2,
                       preferred_element_type=jnp.float32) + b2
        dec2 = beta * mem2 + cur2
        mem2 = jnp.where(mem2 > threshold, dec2 - threshold, dec2)
        spk2 = jnp.where(mem2 > threshold, 1.0, 0.0)

        spk_out_ref[:, tt, :] = spk2.astype(spk_out_ref.dtype)
        mem_out_ref[:, tt, :] = mem2.astype(mem_out_ref.dtype)
        return mem1, mem2

    mem1, mem2 = lax.fori_loop(0, tt_steps, step,
                               (mem1_ref[...], mem2_ref[...]),
                               unroll=True)
    mem1_ref[...] = mem1
    mem2_ref[...] = mem2


def snn_forward(x, w1, b1, w2, b2, *, beta, threshold=1.0,
                matmul_dtype=jnp.float32, time_block=32, batch_block=128):
    """x: (B, T, num_inputs) f32. Returns (spk2_rec, mem2_rec), each
    (B, T, num_outputs) f32, matching the PyTorch module's outputs."""
    B, T, I = x.shape
    H = w1.shape[1]
    O = w2.shape[1]

    # ---- tile selection (keeps block dims (8,128)-friendly) ----
    TB = batch_block if B >= batch_block else _round_up(B, 8)
    B_pad = _round_up(B, TB)

    T_pad = _round_up(T, 8)
    if time_block >= 32 and T_pad % 32 == 0:
        TT = 32
    elif time_block >= 16 and T_pad % 16 == 0:
        TT = 16
    else:
        TT = 8

    if (B_pad, T_pad) != (B, T):
        x = jnp.pad(x, ((0, B_pad - B), (0, T_pad - T), (0, 0)))

    # ---- explicit VMEM budget (double-buffered blocks + weights + state) ----
    f32b = 4
    est = (2 * TB * TT * I * f32b                      # x blocks
           + 2 * (I * H + H + H * O + O) * f32b        # weights/biases (2x buffered)
           + 2 * 2 * TB * TT * O * f32b                # two outputs, 2x buffered
           + (TB * H + TB * O) * f32b)                 # membrane scratch
    vmem_limit = int(min(max(2 * est, 8 << 20), 64 << 20))

    kernel = functools.partial(_snn_kernel, beta=float(beta),
                               threshold=float(threshold),
                               matmul_dtype=matmul_dtype)

    spk_rec, mem_rec = pl.pallas_call(
        kernel,
        out_shape=(jax.ShapeDtypeStruct((B_pad, T_pad, O), jnp.float32),
                   jax.ShapeDtypeStruct((B_pad, T_pad, O), jnp.float32)),
        grid_spec=pltpu.PrefetchScalarGridSpec(
            num_scalar_prefetch=0,
            grid=(B_pad // TB, T_pad // TT),
            in_specs=[
                pl.BlockSpec((TB, TT, I), lambda b, t: (b, t, 0)),  # x
                pl.BlockSpec((I, H), lambda b, t: (0, 0)),          # W1 (in, hid)
                pl.BlockSpec((1, H), lambda b, t: (0, 0)),          # b1
                pl.BlockSpec((H, O), lambda b, t: (0, 0)),          # W2 (hid, out)
                pl.BlockSpec((1, O), lambda b, t: (0, 0)),          # b2
            ],
            out_specs=[
                pl.BlockSpec((TB, TT, O), lambda b, t: (b, t, 0)),  # spk2 record
                pl.BlockSpec((TB, TT, O), lambda b, t: (b, t, 0)),  # mem2 record
            ],
            scratch_shapes=[
                pltpu.VMEM((TB, H), jnp.float32),  # mem1 state (persists over time blocks)
                pltpu.VMEM((TB, O), jnp.float32),  # mem2 state
            ],
        ),
        compiler_params=pltpu.CompilerParams(
            dimension_semantics=("parallel", "arbitrary"),  # batch || , time sequential
            vmem_limit_bytes=vmem_limit,
        ),
    )(x, w1, b1, w2, b2)

    if (B_pad, T_pad) != (B, T):
        spk_rec = spk_rec[:B, :T, :]
        mem_rec = mem_rec[:B, :T, :]
    return spk_rec, mem_rec


def init_params(key, num_inputs, num_hidden, num_outputs):
    """Deterministic init mimicking nn.Linear's U(-1/sqrt(fan_in), 1/sqrt(fan_in)).
    Weights are stored transposed: (in_features, out_features)."""
    k1, k2, k3, k4 = jax.random.split(key, 4)
    lim1 = 1.0 / jnp.sqrt(jnp.float32(num_inputs))
    lim2 = 1.0 / jnp.sqrt(jnp.float32(num_hidden))
    w1 = jax.random.uniform(k1, (num_inputs, num_hidden), jnp.float32, -lim1, lim1)
    b1 = jax.random.uniform(k2, (1, num_hidden), jnp.float32, -lim1, lim1)
    w2 = jax.random.uniform(k3, (num_hidden, num_outputs), jnp.float32, -lim2, lim2)
    b2 = jax.random.uniform(k4, (1, num_outputs), jnp.float32, -lim2, lim2)
    return w1, b1, w2, b2


if __name__ == "__main__":
    # Small shapes consistent with the module's forward: x is (B, T, num_inputs)
    B, T = 2, 8
    num_inputs, num_hidden, num_outputs = 16, 32, 4
    beta = 0.9

    key = jax.random.PRNGKey(0)
    kx, kp = jax.random.split(key)
    x = jax.random.normal(kx, (B, T, num_inputs), jnp.float32)
    w1, b1, w2, b2 = init_params(kp, num_inputs, num_hidden, num_outputs)

    spk2_rec, mem2_rec = snn_forward(x, w1, b1, w2, b2, beta=beta)
    jax.block_until_ready((spk2_rec, mem2_rec))

    assert spk2_rec.shape == (B, T, num_outputs)
    assert mem2_rec.shape == (B, T, num_outputs)
    assert bool(jnp.all(jnp.isfinite(mem2_rec)))
    print("KERNEL_OK")
</pallas_src>

<mosaic_0001>
module attributes {stable_mosaic.version = 11 : i64} {
  func.func @_snn_kernel(%arg0: i32, %arg1: i32, %arg2: memref<8x8x16xf32, #tpu.memory_space<vmem>>, %arg3: memref<16x32xf32, #tpu.memory_space<vmem>>, %arg4: memref<1x32xf32, #tpu.memory_space<vmem>>, %arg5: memref<32x4xf32, #tpu.memory_space<vmem>>, %arg6: memref<1x4xf32, #tpu.memory_space<vmem>>, %arg7: memref<8x8x4xf32, #tpu.memory_space<vmem>>, %arg8: memref<8x8x4xf32, #tpu.memory_space<vmem>>, %arg9: memref<8x32xf32, #tpu.memory_space<vmem>>, %arg10: memref<8x4xf32, #tpu.memory_space<vmem>>) attributes {dimension_semantics = [#tpu.dimension_semantics<parallel>, #tpu.dimension_semantics<arbitrary>], iteration_bounds = array<i64: 1, 1>, scalar_prefetch = 0 : i64, scratch_operands = 2 : i64, tpu.core_type = #tpu.core_type<tc>, window_params = [{transform_indices = @transform_0, window_bounds = array<i64: 8, 8, 16>}, {pipeline_mode = #tpu.pipeline_mode<synchronous>, transform_indices = @transform_1, window_bounds = array<i64: 16, 32>}, {pipeline_mode = #tpu.pipeline_mode<synchronous>, transform_indices = @transform_2, window_bounds = array<i64: 1, 32>}, {pipeline_mode = #tpu.pipeline_mode<synchronous>, transform_indices = @transform_3, window_bounds = array<i64: 32, 4>}, {pipeline_mode = #tpu.pipeline_mode<synchronous>, transform_indices = @transform_4, window_bounds = array<i64: 1, 4>}, {transform_indices = @transform_5, window_bounds = array<i64: 8, 8, 4>}, {transform_indices = @transform_6, window_bounds = array<i64: 8, 8, 4>}]} {
    %c0_i32 = arith.constant 0 : i32
    %0 = arith.cmpi eq, %arg1, %c0_i32 : i32
    %1 = arith.extui %0 : i1 to i32
    %c0_i32_0 = arith.constant 0 : i32
    %2 = arith.cmpi ne, %1, %c0_i32_0 : i32
    scf.if %2 {
      %cst_176 = arith.constant 0.000000e+00 : f32
      %355 = vector.broadcast %cst_176 : f32 to vector<8x32xf32>
      %c0_177 = arith.constant 0 : index
      %c0_178 = arith.constant 0 : index
      %356 = vector.load %arg9[%c0_177, %c0_178] : memref<8x32xf32, #tpu.memory_space<vmem>>, vector<8x32xf32>
      tpu.vector_store %arg9[%c0_177, %c0_178], %355 {strides = array<i32>} : memref<8x32xf32, #tpu.memory_space<vmem>>, vector<8x32xf32>,
      %cst_179 = arith.constant 0.000000e+00 : f32
      %357 = vector.broadcast %cst_179 : f32 to vector<8x4xf32>
      %c0_180 = arith.constant 0 : index
      %c0_181 = arith.constant 0 : index
      %358 = vector.load %arg10[%c0_180, %c0_181] : memref<8x4xf32, #tpu.memory_space<vmem>>, vector<8x4xf32>
      tpu.vector_store %arg10[%c0_180, %c0_181], %357 {strides = array<i32>} : memref<8x4xf32, #tpu.memory_space<vmem>>, vector<8x4xf32>,
    } else {
    }
    %c0 = arith.constant 0 : index
    %c0_1 = arith.constant 0 : index
    %3 = vector.load %arg3[%c0, %c0_1] : memref<16x32xf32, #tpu.memory_space<vmem>>, vector<16x32xf32>
    %c0_2 = arith.constant 0 : index
    %c0_3 = arith.constant 0 : index
    %4 = vector.load %arg5[%c0_2, %c0_3] : memref<32x4xf32, #tpu.memory_space<vmem>>, vector<32x4xf32>
    %c0_4 = arith.constant 0 : index
    %c0_5 = arith.constant 0 : index
    %5 = vector.load %arg4[%c0_4, %c0_5] : memref<1x32xf32, #tpu.memory_space<vmem>>, vector<1x32xf32>
    %c0_6 = arith.constant 0 : index
    %c0_7 = arith.constant 0 : index
    %6 = vector.load %arg6[%c0_6, %c0_7] : memref<1x4xf32, #tpu.memory_space<vmem>>, vector<1x4xf32>
    %c0_8 = arith.constant 0 : index
    %c0_9 = arith.constant 0 : index
    %7 = vector.load %arg9[%c0_8, %c0_9] : memref<8x32xf32, #tpu.memory_space<vmem>>, vector<8x32xf32>
    %c0_10 = arith.constant 0 : index
    %c0_11 = arith.constant 0 : index
    %8 = vector.load %arg10[%c0_10, %c0_11] : memref<8x4xf32, #tpu.memory_space<vmem>>, vector<8x4xf32>
    %c0_i32_12 = arith.constant 0 : i32
    %c0_13 = arith.constant 0 : index
    %9 = arith.index_cast %c0_i32_12 : i32 to index
    %c0_14 = arith.constant 0 : index
    %10 = vector.load %arg2[%c0_13, %9, %c0_14] : memref<8x8x16xf32, #tpu.memory_space<vmem>>, vector<8x1x16xf32>
    %11 = vector.shape_cast %10 : vector<8x1x16xf32> to vector<8x16xf32>
    %cst = arith.constant dense<0.000000e+00> : vector<8x32xf32>
    %12 = tpu.matmul %11, %3, %cst {dimension_numbers = #tpu.dot_dimension_numbers<[1], [0], [0], [1], [0, 0, 1, 1], [], []>} : vector<8x16xf32>, vector<16x32xf32>, vector<8x32xf32> -> vector<8x32xf32>
    %13 = vector.broadcast %5 : vector<1x32xf32> to vector<8x32xf32>
    %14 = arith.addf %12, %13 : vector<8x32xf32>
    %cst_15 = arith.constant 0.899999976 : f32
    %15 = vector.broadcast %cst_15 : f32 to vector<8x32xf32>
    %16 = arith.mulf %15, %7 : vector<8x32xf32>
    %17 = arith.addf %16, %14 : vector<8x32xf32>
    %cst_16 = arith.constant 1.000000e+00 : f32
    %18 = vector.broadcast %cst_16 : f32 to vector<8x32xf32>
    %19 = arith.cmpf ogt, %7, %18 : vector<8x32xf32>
    %cst_17 = arith.constant 1.000000e+00 : f32
    %20 = vector.broadcast %cst_17 : f32 to vector<8x32xf32>
    %21 = arith.subf %17, %20 : vector<8x32xf32>
    %22 = arith.select %19, %21, %17 : vector<8x32xi1>, vector<8x32xf32>
    %cst_18 = arith.constant 1.000000e+00 : f32
    %23 = vector.broadcast %cst_18 : f32 to vector<8x32xf32>
    %24 = arith.cmpf ogt, %22, %23 : vector<8x32xf32>
    %cst_19 = arith.constant 1.000000e+00 : f32
    %cst_20 = arith.constant 0.000000e+00 : f32
    %25 = vector.broadcast %cst_19 : f32 to vector<8x32xf32>
    %26 = vector.broadcast %cst_20 : f32 to vector<8x32xf32>
    %27 = arith.select %24, %25, %26 : vector<8x32xi1>, vector<8x32xf32>
    %cst_21 = arith.constant dense<0.000000e+00> : vector<8x4xf32>
    %28 = tpu.matmul %27, %4, %cst_21 {dimension_numbers = #tpu.dot_dimension_numbers<[1], [0], [0], [1], [0, 0, 1, 1], [], []>} : vector<8x32xf32>, vector<32x4xf32>, vector<8x4xf32> -> vector<8x4xf32>
    %29 = vector.broadcast %6 : vector<1x4xf32> to vector<8x4xf32>
    %30 = arith.addf %28, %29 : vector<8x4xf32>
    %cst_22 = arith.constant 0.899999976 : f32
    %31 = vector.broadcast %cst_22 : f32 to vector<8x4xf32>
    %32 = arith.mulf %31, %8 : vector<8x4xf32>
    %33 = arith.addf %32, %30 : vector<8x4xf32>
    %cst_23 = arith.constant 1.000000e+00 : f32
    %34 = vector.broadcast %cst_23 : f32 to vector<8x4xf32>
    %35 = arith.cmpf ogt, %8, %34 : vector<8x4xf32>
    %cst_24 = arith.constant 1.000000e+00 : f32
    %36 = vector.broadcast %cst_24 : f32 to vector<8x4xf32>
    %37 = arith.subf %33, %36 : vector<8x4xf32>
    %38 = arith.select %35, %37, %33 : vector<8x4xi1>, vector<8x4xf32>
    %cst_25 = arith.constant 1.000000e+00 : f32
    %39 = vector.broadcast %cst_25 : f32 to vector<8x4xf32>
    %40 = arith.cmpf ogt, %38, %39 : vector<8x4xf32>
    %cst_26 = arith.constant 1.000000e+00 : f32
    %cst_27 = arith.constant 0.000000e+00 : f32
    %41 = vector.broadcast %cst_26 : f32 to vector<8x4xf32>
    %42 = vector.broadcast %cst_27 : f32 to vector<8x4xf32>
    %43 = arith.select %40, %41, %42 : vector<8x4xi1>, vector<8x4xf32>
    %c0_28 = arith.constant 0 : index
    %44 = arith.index_cast %c0_i32_12 : i32 to index
    %c0_29 = arith.constant 0 : index
    %45 = vector.load %arg7[%c0_28, %44, %c0_29] : memref<8x8x4xf32, #tpu.memory_space<vmem>>, vector<8x1x4xf32>
    %46 = vector.shape_cast %45 : vector<8x1x4xf32> to vector<8x4xf32>
    %47 = vector.shape_cast %43 : vector<8x4xf32> to vector<8x1x4xf32>
    tpu.vector_store %arg7[%c0_28, %44, %c0_29], %47 {strides = array<i32>} : memref<8x8x4xf32, #tpu.memory_space<vmem>>, vector<8x1x4xf32>,
    %c0_30 = arith.constant 0 : index
    %48 = arith.index_cast %c0_i32_12 : i32 to index
    %c0_31 = arith.constant 0 : index
    %49 = vector.load %arg8[%c0_30, %48, %c0_31] : memref<8x8x4xf32, #tpu.memory_space<vmem>>, vector<8x1x4xf32>
    %50 = vector.shape_cast %49 : vector<8x1x4xf32> to vector<8x4xf32>
    %51 = vector.shape_cast %38 : vector<8x4xf32> to vector<8x1x4xf32>
    tpu.vector_store %arg8[%c0_30, %48, %c0_31], %51 {strides = array<i32>} : memref<8x8x4xf32, #tpu.memory_space<vmem>>, vector<8x1x4xf32>,
    %c1_i32 = arith.constant 1 : i32
    %c0_32 = arith.constant 0 : index
    %52 = arith.index_cast %c1_i32 : i32 to index
    %c0_33 = arith.constant 0 : index
    %53 = vector.load %arg2[%c0_32, %52, %c0_33] : memref<8x8x16xf32, #tpu.memory_space<vmem>>, vector<8x1x16xf32>
    %54 = vector.shape_cast %53 : vector<8x1x16xf32> to vector<8x16xf32>
    %cst_34 = arith.constant dense<0.000000e+00> : vector<8x32xf32>
    %55 = tpu.matmul %54, %3, %cst_34 {dimension_numbers = #tpu.dot_dimension_numbers<[1], [0], [0], [1], [0, 0, 1, 1], [], []>} : vector<8x16xf32>, vector<16x32xf32>, vector<8x32xf32> -> vector<8x32xf32>
    %56 = vector.broadcast %5 : vector<1x32xf32> to vector<8x32xf32>
    %57 = arith.addf %55, %56 : vector<8x32xf32>
    %cst_35 = arith.constant 0.899999976 : f32
    %58 = vector.broadcast %cst_35 : f32 to vector<8x32xf32>
    %59 = arith.mulf %58, %22 : vector<8x32xf32>
    %60 = arith.addf %59, %57 : vector<8x32xf32>
    %cst_36 = arith.constant 1.000000e+00 : f32
    %61 = vector.broadcast %cst_36 : f32 to vector<8x32xf32>
    %62 = arith.cmpf ogt, %22, %61 : vector<8x32xf32>
    %cst_37 = arith.constant 1.000000e+00 : f32
    %63 = vector.broadcast %cst_37 : f32 to vector<8x32xf32>
    %64 = arith.subf %60, %63 : vector<8x32xf32>
    %65 = arith.select %62, %64, %60 : vector<8x32xi1>, vector<8x32xf32>
    %cst_38 = arith.constant 1.000000e+00 : f32
    %66 = vector.broadcast %cst_38 : f32 to vector<8x32xf32>
    %67 = arith.cmpf ogt, %65, %66 : vector<8x32xf32>
    %cst_39 = arith.constant 1.000000e+00 : f32
    %cst_40 = arith.constant 0.000000e+00 : f32
    %68 = vector.broadcast %cst_39 : f32 to vector<8x32xf32>
    %69 = vector.broadcast %cst_40 : f32 to vector<8x32xf32>
    %70 = arith.select %67, %68, %69 : vector<8x32xi1>, vector<8x32xf32>
    %cst_41 = arith.constant dense<0.000000e+00> : vector<8x4xf32>
    %71 = tpu.matmul %70, %4, %cst_41 {dimension_numbers = #tpu.dot_dimension_numbers<[1], [0], [0], [1], [0, 0, 1, 1], [], []>} : vector<8x32xf32>, vector<32x4xf32>, vector<8x4xf32> -> vector<8x4xf32>
    %72 = vector.broadcast %6 : vector<1x4xf32> to vector<8x4xf32>
    %73 = arith.addf %71, %72 : vector<8x4xf32>
    %cst_42 = arith.constant 0.899999976 : f32
    %74 = vector.broadcast %cst_42 : f32 to vector<8x4xf32>
    %75 = arith.mulf %74, %38 : vector<8x4xf32>
    %76 = arith.addf %75, %73 : vector<8x4xf32>
    %cst_43 = arith.constant 1.000000e+00 : f32
    %77 = vector.broadcast %cst_43 : f32 to vector<8x4xf32>
    %78 = arith.cmpf ogt, %38, %77 : vector<8x4xf32>
    %cst_44 = arith.constant 1.000000e+00 : f32
    %79 = vector.broadcast %cst_44 : f32 to vector<8x4xf32>
    %80 = arith.subf %76, %79 : vector<8x4xf32>
    %81 = arith.select %78, %80, %76 : vector<8x4xi1>, vector<8x4xf32>
    %cst_45 = arith.constant 1.000000e+00 : f32
    %82 = vector.broadcast %cst_45 : f32 to vector<8x4xf32>
    %83 = arith.cmpf ogt, %81, %82 : vector<8x4xf32>
    %cst_46 = arith.constant 1.000000e+00 : f32
    %cst_47 = arith.constant 0.000000e+00 : f32
    %84 = vector.broadcast %cst_46 : f32 to vector<8x4xf32>
    %85 = vector.broadcast %cst_47 : f32 to vector<8x4xf32>
    %86 = arith.select %83, %84, %85 : vector<8x4xi1>, vector<8x4xf32>
    %c0_48 = arith.constant 0 : index
    %87 = arith.index_cast %c1_i32 : i32 to index
    %c0_49 = arith.constant 0 : index
    %88 = vector.load %arg7[%c0_48, %87, %c0_49] : memref<8x8x4xf32, #tpu.memory_space<vmem>>, vector<8x1x4xf32>
    %89 = vector.shape_cast %88 : vector<8x1x4xf32> to vector<8x4xf32>
    %90 = vector.shape_cast %86 : vector<8x4xf32> to vector<8x1x4xf32>
    tpu.vector_store %arg7[%c0_48, %87, %c0_49], %90 {strides = array<i32>} : memref<8x8x4xf32, #tpu.memory_space<vmem>>, vector<8x1x4xf32>,
    %c0_50 = arith.constant 0 : index
    %91 = arith.index_cast %c1_i32 : i32 to index
    %c0_51 = arith.constant 0 : index
    %92 = vector.load %arg8[%c0_50, %91, %c0_51] : memref<8x8x4xf32, #tpu.memory_space<vmem>>, vector<8x1x4xf32>
    %93 = vector.shape_cast %92 : vector<8x1x4xf32> to vector<8x4xf32>
    %94 = vector.shape_cast %81 : vector<8x4xf32> to vector<8x1x4xf32>
    tpu.vector_store %arg8[%c0_50, %91, %c0_51], %94 {strides = array<i32>} : memref<8x8x4xf32, #tpu.memory_space<vmem>>, vector<8x1x4xf32>,
    %c2_i32 = arith.constant 2 : i32
    %c0_52 = arith.constant 0 : index
    %95 = arith.index_cast %c2_i32 : i32 to index
    %c0_53 = arith.constant 0 : index
    %96 = vector.load %arg2[%c0_52, %95, %c0_53] : memref<8x8x16xf32, #tpu.memory_space<vmem>>, vector<8x1x16xf32>
    %97 = vector.shape_cast %96 : vector<8x1x16xf32> to vector<8x16xf32>
    %cst_54 = arith.constant dense<0.000000e+00> : vector<8x32xf32>
    %98 = tpu.matmul %97, %3, %cst_54 {dimension_numbers = #tpu.dot_dimension_numbers<[1], [0], [0], [1], [0, 0, 1, 1], [], []>} : vector<8x16xf32>, vector<16x32xf32>, vector<8x32xf32> -> vector<8x32xf32>
    %99 = vector.broadcast %5 : vector<1x32xf32> to vector<8x32xf32>
    %100 = arith.addf %98, %99 : vector<8x32xf32>
    %cst_55 = arith.constant 0.899999976 : f32
    %101 = vector.broadcast %cst_55 : f32 to vector<8x32xf32>
    %102 = arith.mulf %101, %65 : vector<8x32xf32>
    %103 = arith.addf %102, %100 : vector<8x32xf32>
    %cst_56 = arith.constant 1.000000e+00 : f32
    %104 = vector.broadcast %cst_56 : f32 to vector<8x32xf32>
    %105 = arith.cmpf ogt, %65, %104 : vector<8x32xf32>
    %cst_57 = arith.constant 1.000000e+00 : f32
    %106 = vector.broadcast %cst_57 : f32 to vector<8x32xf32>
    %107 = arith.subf %103, %106 : vector<8x32xf32>
    %108 = arith.select %105, %107, %103 : vector<8x32xi1>, vector<8x32xf32>
    %cst_58 = arith.constant 1.000000e+00 : f32
    %109 = vector.broadcast %cst_58 : f32 to vector<8x32xf32>
    %110 = arith.cmpf ogt, %108, %109 : vector<8x32xf32>
    %cst_59 = arith.constant 1.000000e+00 : f32
    %cst_60 = arith.constant 0.000000e+00 : f32
    %111 = vector.broadcast %cst_59 : f32 to vector<8x32xf32>
    %112 = vector.broadcast %cst_60 : f32 to vector<8x32xf32>
    %113 = arith.select %110, %111, %112 : vector<8x32xi1>, vector<8x32xf32>
    %cst_61 = arith.constant dense<0.000000e+00> : vector<8x4xf32>
    %114 = tpu.matmul %113, %4, %cst_61 {dimension_numbers = #tpu.dot_dimension_numbers<[1], [0], [0], [1], [0, 0, 1, 1], [], []>} : vector<8x32xf32>, vector<32x4xf32>, vector<8x4xf32> -> vector<8x4xf32>
    %115 = vector.broadcast %6 : vector<1x4xf32> to vector<8x4xf32>
    %116 = arith.addf %114, %115 : vector<8x4xf32>
    %cst_62 = arith.constant 0.899999976 : f32
    %117 = vector.broadcast %cst_62 : f32 to vector<8x4xf32>
    %118 = arith.mulf %117, %81 : vector<8x4xf32>
    %119 = arith.addf %118, %116 : vector<8x4xf32>
    %cst_63 = arith.constant 1.000000e+00 : f32
    %120 = vector.broadcast %cst_63 : f32 to vector<8x4xf32>
    %121 = arith.cmpf ogt, %81, %120 : vector<8x4xf32>
    %cst_64 = arith.constant 1.000000e+00 : f32
    %122 = vector.broadcast %cst_64 : f32 to vector<8x4xf32>
    %123 = arith.subf %119, %122 : vector<8x4xf32>
    %124 = arith.select %121, %123, %119 : vector<8x4xi1>, vector<8x4xf32>
    %cst_65 = arith.constant 1.000000e+00 : f32
    %125 = vector.broadcast %cst_65 : f32 to vector<8x4xf32>
    %126 = arith.cmpf ogt, %124, %125 : vector<8x4xf32>
    %cst_66 = arith.constant 1.000000e+00 : f32
    %cst_67 = arith.constant 0.000000e+00 : f32
    %127 = vector.broadcast %cst_66 : f32 to vector<8x4xf32>
    %128 = vector.broadcast %cst_67 : f32 to vector<8x4xf32>
    %129 = arith.select %126, %127, %128 : vector<8x4xi1>, vector<8x4xf32>
    %c0_68 = arith.constant 0 : index
    %130 = arith.index_cast %c2_i32 : i32 to index
    %c0_69 = arith.constant 0 : index
    %131 = vector.load %arg7[%c0_68, %130, %c0_69] : memref<8x8x4xf32, #tpu.memory_space<vmem>>, vector<8x1x4xf32>
    %132 = vector.shape_cast %131 : vector<8x1x4xf32> to vector<8x4xf32>
    %133 = vector.shape_cast %129 : vector<8x4xf32> to vector<8x1x4xf32>
    tpu.vector_store %arg7[%c0_68, %130, %c0_69], %133 {strides = array<i32>} : memref<8x8x4xf32, #tpu.memory_space<vmem>>, vector<8x1x4xf32>,
    %c0_70 = arith.constant 0 : index
    %134 = arith.index_cast %c2_i32 : i32 to index
    %c0_71 = arith.constant 0 : index
    %135 = vector.load %arg8[%c0_70, %134, %c0_71] : memref<8x8x4xf32, #tpu.memory_space<vmem>>, vector<8x1x4xf32>
    %136 = vector.shape_cast %135 : vector<8x1x4xf32> to vector<8x4xf32>
    %137 = vector.shape_cast %124 : vector<8x4xf32> to vector<8x1x4xf32>
    tpu.vector_store %arg8[%c0_70, %134, %c0_71], %137 {strides = array<i32>} : memref<8x8x4xf32, #tpu.memory_space<vmem>>, vector<8x1x4xf32>,
    %c3_i32 = arith.constant 3 : i32
    %c0_72 = arith.constant 0 : index
    %138 = arith.index_cast %c3_i32 : i32 to index
    %c0_73 = arith.constant 0 : index
    %139 = vector.load %arg2[%c0_72, %138, %c0_73] : memref<8x8x16xf32, #tpu.memory_space<vmem>>, vector<8x1x16xf32>
    %140 = vector.shape_cast %139 : vector<8x1x16xf32> to vector<8x16xf32>
    %cst_74 = arith.constant dense<0.000000e+00> : vector<8x32xf32>
    %141 = tpu.matmul %140, %3, %cst_74 {dimension_numbers = #tpu.dot_dimension_numbers<[1], [0], [0], [1], [0, 0, 1, 1], [], []>} : vector<8x16xf32>, vector<16x32xf32>, vector<8x32xf32> -> vector<8x32xf32>
    %142 = vector.broadcast %5 : vector<1x32xf32> to vector<8x32xf32>
    %143 = arith.addf %141, %142 : vector<8x32xf32>
    %cst_75 = arith.constant 0.899999976 : f32
    %144 = vector.broadcast %cst_75 : f32 to vector<8x32xf32>
    %145 = arith.mulf %144, %108 : vector<8x32xf32>
    %146 = arith.addf %145, %143 : vector<8x32xf32>
    %cst_76 = arith.constant 1.000000e+00 : f32
    %147 = vector.broadcast %cst_76 : f32 to vector<8x32xf32>
    %148 = arith.cmpf ogt, %108, %147 : vector<8x32xf32>
    %cst_77 = arith.constant 1.000000e+00 : f32
    %149 = vector.broadcast %cst_77 : f32 to vector<8x32xf32>
    %150 = arith.subf %146, %149 : vector<8x32xf32>
    %151 = arith.select %148, %150, %146 : vector<8x32xi1>, vector<8x32xf32>
    %cst_78 = arith.constant 1.000000e+00 : f32
    %152 = vector.broadcast %cst_78 : f32 to vector<8x32xf32>
    %153 = arith.cmpf ogt, %151, %152 : vector<8x32xf32>
    %cst_79 = arith.constant 1.000000e+00 : f32
    %cst_80 = arith.constant 0.000000e+00 : f32
    %154 = vector.broadcast %cst_79 : f32 to vector<8x32xf32>
    %155 = vector.broadcast %cst_80 : f32 to vector<8x32xf32>
    %156 = arith.select %153, %154, %155 : vector<8x32xi1>, vector<8x32xf32>
    %cst_81 = arith.constant dense<0.000000e+00> : vector<8x4xf32>
    %157 = tpu.matmul %156, %4, %cst_81 {dimension_numbers = #tpu.dot_dimension_numbers<[1], [0], [0], [1], [0, 0, 1, 1], [], []>} : vector<8x32xf32>, vector<32x4xf32>, vector<8x4xf32> -> vector<8x4xf32>
    %158 = vector.broadcast %6 : vector<1x4xf32> to vector<8x4xf32>
    %159 = arith.addf %157, %158 : vector<8x4xf32>
    %cst_82 = arith.constant 0.899999976 : f32
    %160 = vector.broadcast %cst_82 : f32 to vector<8x4xf32>
    %161 = arith.mulf %160, %124 : vector<8x4xf32>
    %162 = arith.addf %161, %159 : vector<8x4xf32>
    %cst_83 = arith.constant 1.000000e+00 : f32
    %163 = vector.broadcast %cst_83 : f32 to vector<8x4xf32>
    %164 = arith.cmpf ogt, %124, %163 : vector<8x4xf32>
    %cst_84 = arith.constant 1.000000e+00 : f32
    %165 = vector.broadcast %cst_84 : f32 to vector<8x4xf32>
    %166 = arith.subf %162, %165 : vector<8x4xf32>
    %167 = arith.select %164, %166, %162 : vector<8x4xi1>, vector<8x4xf32>
    %cst_85 = arith.constant 1.000000e+00 : f32
    %168 = vector.broadcast %cst_85 : f32 to vector<8x4xf32>
    %169 = arith.cmpf ogt, %167, %168 : vector<8x4xf32>
    %cst_86 = arith.constant 1.000000e+00 : f32
    %cst_87 = arith.constant 0.000000e+00 : f32
    %170 = vector.broadcast %cst_86 : f32 to vector<8x4xf32>
    %171 = vector.broadcast %cst_87 : f32 to vector<8x4xf32>
    %172 = arith.select %169, %170, %171 : vector<8x4xi1>, vector<8x4xf32>
    %c0_88 = arith.constant 0 : index
    %173 = arith.index_cast %c3_i32 : i32 to index
    %c0_89 = arith.constant 0 : index
    %174 = vector.load %arg7[%c0_88, %173, %c0_89] : memref<8x8x4xf32, #tpu.memory_space<vmem>>, vector<8x1x4xf32>
    %175 = vector.shape_cast %174 : vector<8x1x4xf32> to vector<8x4xf32>
    %176 = vector.shape_cast %172 : vector<8x4xf32> to vector<8x1x4xf32>
    tpu.vector_store %arg7[%c0_88, %173, %c0_89], %176 {strides = array<i32>} : memref<8x8x4xf32, #tpu.memory_space<vmem>>, vector<8x1x4xf32>,
    %c0_90 = arith.constant 0 : index
    %177 = arith.index_cast %c3_i32 : i32 to index
    %c0_91 = arith.constant 0 : index
    %178 = vector.load %arg8[%c0_90, %177, %c0_91] : memref<8x8x4xf32, #tpu.memory_space<vmem>>, vector<8x1x4xf32>
    %179 = vector.shape_cast %178 : vector<8x1x4xf32> to vector<8x4xf32>
    %180 = vector.shape_cast %167 : vector<8x4xf32> to vector<8x1x4xf32>
    tpu.vector_store %arg8[%c0_90, %177, %c0_91], %180 {strides = array<i32>} : memref<8x8x4xf32, #tpu.memory_space<vmem>>, vector<8x1x4xf32>,
    %c4_i32 = arith.constant 4 : i32
    %c0_92 = arith.constant 0 : index
    %181 = arith.index_cast %c4_i32 : i32 to index
    %c0_93 = arith.constant 0 : index
    %182 = vector.load %arg2[%c0_92, %181, %c0_93] : memref<8x8x16xf32, #tpu.memory_space<vmem>>, vector<8x1x16xf32>
    %183 = vector.shape_cast %182 : vector<8x1x16xf32> to vector<8x16xf32>
    %cst_94 = arith.constant dense<0.000000e+00> : vector<8x32xf32>
    %184 = tpu.matmul %183, %3, %cst_94 {dimension_numbers = #tpu.dot_dimension_numbers<[1], [0], [0], [1], [0, 0, 1, 1], [], []>} : vector<8x16xf32>, vector<16x32xf32>, vector<8x32xf32> -> vector<8x32xf32>
    %185 = vector.broadcast %5 : vector<1x32xf32> to vector<8x32xf32>
    %186 = arith.addf %184, %185 : vector<8x32xf32>
    %cst_95 = arith.constant 0.899999976 : f32
    %187 = vector.broadcast %cst_95 : f32 to vector<8x32xf32>
    %188 = arith.mulf %187, %151 : vector<8x32xf32>
    %189 = arith.addf %188, %186 : vector<8x32xf32>
    %cst_96 = arith.constant 1.000000e+00 : f32
    %190 = vector.broadcast %cst_96 : f32 to vector<8x32xf32>
    %191 = arith.cmpf ogt, %151, %190 : vector<8x32xf32>
    %cst_97 = arith.constant 1.000000e+00 : f32
    %192 = vector.broadcast %cst_97 : f32 to vector<8x32xf32>
    %193 = arith.subf %189, %192 : vector<8x32xf32>
    %194 = arith.select %191, %193, %189 : vector<8x32xi1>, vector<8x32xf32>
    %cst_98 = arith.constant 1.000000e+00 : f32
    %195 = vector.broadcast %cst_98 : f32 to vector<8x32xf32>
    %196 = arith.cmpf ogt, %194, %195 : vector<8x32xf32>
    %cst_99 = arith.constant 1.000000e+00 : f32
    %cst_100 = arith.constant 0.000000e+00 : f32
    %197 = vector.broadcast %cst_99 : f32 to vector<8x32xf32>
    %198 = vector.broadcast %cst_100 : f32 to vector<8x32xf32>
    %199 = arith.select %196, %197, %198 : vector<8x32xi1>, vector<8x32xf32>
    %cst_101 = arith.constant dense<0.000000e+00> : vector<8x4xf32>
    %200 = tpu.matmul %199, %4, %cst_101 {dimension_numbers = #tpu.dot_dimension_numbers<[1], [0], [0], [1], [0, 0, 1, 1], [], []>} : vector<8x32xf32>, vector<32x4xf32>, vector<8x4xf32> -> vector<8x4xf32>
    %201 = vector.broadcast %6 : vector<1x4xf32> to vector<8x4xf32>
    %202 = arith.addf %200, %201 : vector<8x4xf32>
    %cst_102 = arith.constant 0.899999976 : f32
    %203 = vector.broadcast %cst_102 : f32 to vector<8x4xf32>
    %204 = arith.mulf %203, %167 : vector<8x4xf32>
    %205 = arith.addf %204, %202 : vector<8x4xf32>
    %cst_103 = arith.constant 1.000000e+00 : f32
    %206 = vector.broadcast %cst_103 : f32 to vector<8x4xf32>
    %207 = arith.cmpf ogt, %167, %206 : vector<8x4xf32>
    %cst_104 = arith.constant 1.000000e+00 : f32
    %208 = vector.broadcast %cst_104 : f32 to vector<8x4xf32>
    %209 = arith.subf %205, %208 : vector<8x4xf32>
    %210 = arith.select %207, %209, %205 : vector<8x4xi1>, vector<8x4xf32>
    %cst_105 = arith.constant 1.000000e+00 : f32
    %211 = vector.broadcast %cst_105 : f32 to vector<8x4xf32>
    %212 = arith.cmpf ogt, %210, %211 : vector<8x4xf32>
    %cst_106 = arith.constant 1.000000e+00 : f32
    %cst_107 = arith.constant 0.000000e+00 : f32
    %213 = vector.broadcast %cst_106 : f32 to vector<8x4xf32>
    %214 = vector.broadcast %cst_107 : f32 to vector<8x4xf32>
    %215 = arith.select %212, %213, %214 : vector<8x4xi1>, vector<8x4xf32>
    %c0_108 = arith.constant 0 : index
    %216 = arith.index_cast %c4_i32 : i32 to index
    %c0_109 = arith.constant 0 : index
    %217 = vector.load %arg7[%c0_108, %216, %c0_109] : memref<8x8x4xf32, #tpu.memory_space<vmem>>, vector<8x1x4xf32>
    %218 = vector.shape_cast %217 : vector<8x1x4xf32> to vector<8x4xf32>
    %219 = vector.shape_cast %215 : vector<8x4xf32> to vector<8x1x4xf32>
    tpu.vector_store %arg7[%c0_108, %216, %c0_109], %219 {strides = array<i32>} : memref<8x8x4xf32, #tpu.memory_space<vmem>>, vector<8x1x4xf32>,
    %c0_110 = arith.constant 0 : index
    %220 = arith.index_cast %c4_i32 : i32 to index
    %c0_111 = arith.constant 0 : index
    %221 = vector.load %arg8[%c0_110, %220, %c0_111] : memref<8x8x4xf32, #tpu.memory_space<vmem>>, vector<8x1x4xf32>
    %222 = vector.shape_cast %221 : vector<8x1x4xf32> to vector<8x4xf32>
    %223 = vector.shape_cast %210 : vector<8x4xf32> to vector<8x1x4xf32>
    tpu.vector_store %arg8[%c0_110, %220, %c0_111], %223 {strides = array<i32>} : memref<8x8x4xf32, #tpu.memory_space<vmem>>, vector<8x1x4xf32>,
    %c5_i32 = arith.constant 5 : i32
    %c0_112 = arith.constant 0 : index
    %224 = arith.index_cast %c5_i32 : i32 to index
    %c0_113 = arith.constant 0 : index
    %225 = vector.load %arg2[%c0_112, %224, %c0_113] : memref<8x8x16xf32, #tpu.memory_space<vmem>>, vector<8x1x16xf32>
    %226 = vector.shape_cast %225 : vector<8x1x16xf32> to vector<8x16xf32>
    %cst_114 = arith.constant dense<0.000000e+00> : vector<8x32xf32>
    %227 = tpu.matmul %226, %3, %cst_114 {dimension_numbers = #tpu.dot_dimension_numbers<[1], [0], [0], [1], [0, 0, 1, 1], [], []>} : vector<8x16xf32>, vector<16x32xf32>, vector<8x32xf32> -> vector<8x32xf32>
    %228 = vector.broadcast %5 : vector<1x32xf32> to vector<8x32xf32>
    %229 = arith.addf %227, %228 : vector<8x32xf32>
    %cst_115 = arith.constant 0.899999976 : f32
    %230 = vector.broadcast %cst_115 : f32 to vector<8x32xf32>
    %231 = arith.mulf %230, %194 : vector<8x32xf32>
    %232 = arith.addf %231, %229 : vector<8x32xf32>
    %cst_116 = arith.constant 1.000000e+00 : f32
    %233 = vector.broadcast %cst_116 : f32 to vector<8x32xf32>
    %234 = arith.cmpf ogt, %194, %233 : vector<8x32xf32>
    %cst_117 = arith.constant 1.000000e+00 : f32
    %235 = vector.broadcast %cst_117 : f32 to vector<8x32xf32>
    %236 = arith.subf %232, %235 : vector<8x32xf32>
    %237 = arith.select %234, %236, %232 : vector<8x32xi1>, vector<8x32xf32>
    %cst_118 = arith.constant 1.000000e+00 : f32
    %238 = vector.broadcast %cst_118 : f32 to vector<8x32xf32>
    %239 = arith.cmpf ogt, %237, %238 : vector<8x32xf32>
    %cst_119 = arith.constant 1.000000e+00 : f32
    %cst_120 = arith.constant 0.000000e+00 : f32
    %240 = vector.broadcast %cst_119 : f32 to vector<8x32xf32>
    %241 = vector.broadcast %cst_120 : f32 to vector<8x32xf32>
    %242 = arith.select %239, %240, %241 : vector<8x32xi1>, vector<8x32xf32>
    %cst_121 = arith.constant dense<0.000000e+00> : vector<8x4xf32>
    %243 = tpu.matmul %242, %4, %cst_121 {dimension_numbers = #tpu.dot_dimension_numbers<[1], [0], [0], [1], [0, 0, 1, 1], [], []>} : vector<8x32xf32>, vector<32x4xf32>, vector<8x4xf32> -> vector<8x4xf32>
    %244 = vector.broadcast %6 : vector<1x4xf32> to vector<8x4xf32>
    %245 = arith.addf %243, %244 : vector<8x4xf32>
    %cst_122 = arith.constant 0.899999976 : f32
    %246 = vector.broadcast %cst_122 : f32 to vector<8x4xf32>
    %247 = arith.mulf %246, %210 : vector<8x4xf32>
    %248 = arith.addf %247, %245 : vector<8x4xf32>
    %cst_123 = arith.constant 1.000000e+00 : f32
    %249 = vector.broadcast %cst_123 : f32 to vector<8x4xf32>
    %250 = arith.cmpf ogt, %210, %249 : vector<8x4xf32>
    %cst_124 = arith.constant 1.000000e+00 : f32
    %251 = vector.broadcast %cst_124 : f32 to vector<8x4xf32>
    %252 = arith.subf %248, %251 : vector<8x4xf32>
    %253 = arith.select %250, %252, %248 : vector<8x4xi1>, vector<8x4xf32>
    %cst_125 = arith.constant 1.000000e+00 : f32
    %254 = vector.broadcast %cst_125 : f32 to vector<8x4xf32>
    %255 = arith.cmpf ogt, %253, %254 : vector<8x4xf32>
    %cst_126 = arith.constant 1.000000e+00 : f32
    %cst_127 = arith.constant 0.000000e+00 : f32
    %256 = vector.broadcast %cst_126 : f32 to vector<8x4xf32>
    %257 = vector.broadcast %cst_127 : f32 to vector<8x4xf32>
    %258 = arith.select %255, %256, %257 : vector<8x4xi1>, vector<8x4xf32>
    %c0_128 = arith.constant 0 : index
    %259 = arith.index_cast %c5_i32 : i32 to index
    %c0_129 = arith.constant 0 : index
    %260 = vector.load %arg7[%c0_128, %259, %c0_129] : memref<8x8x4xf32, #tpu.memory_space<vmem>>, vector<8x1x4xf32>
    %261 = vector.shape_cast %260 : vector<8x1x4xf32> to vector<8x4xf32>
    %262 = vector.shape_cast %258 : vector<8x4xf32> to vector<8x1x4xf32>
    tpu.vector_store %arg7[%c0_128, %259, %c0_129], %262 {strides = array<i32>} : memref<8x8x4xf32, #tpu.memory_space<vmem>>, vector<8x1x4xf32>,
    %c0_130 = arith.constant 0 : index
    %263 = arith.index_cast %c5_i32 : i32 to index
    %c0_131 = arith.constant 0 : index
    %264 = vector.load %arg8[%c0_130, %263, %c0_131] : memref<8x8x4xf32, #tpu.memory_space<vmem>>, vector<8x1x4xf32>
    %265 = vector.shape_cast %264 : vector<8x1x4xf32> to vector<8x4xf32>
    %266 = vector.shape_cast %253 : vector<8x4xf32> to vector<8x1x4xf32>
    tpu.vector_store %arg8[%c0_130, %263, %c0_131], %266 {strides = array<i32>} : memref<8x8x4xf32, #tpu.memory_space<vmem>>, vector<8x1x4xf32>,
    %c6_i32 = arith.constant 6 : i32
    %c0_132 = arith.constant 0 : index
    %267 = arith.index_cast %c6_i32 : i32 to index
    %c0_133 = arith.constant 0 : index
    %268 = vector.load %arg2[%c0_132, %267, %c0_133] : memref<8x8x16xf32, #tpu.memory_space<vmem>>, vector<8x1x16xf32>
    %269 = vector.shape_cast %268 : vector<8x1x16xf32> to vector<8x16xf32>
    %cst_134 = arith.constant dense<0.000000e+00> : vector<8x32xf32>
    %270 = tpu.matmul %269, %3, %cst_134 {dimension_numbers = #tpu.dot_dimension_numbers<[1], [0], [0], [1], [0, 0, 1, 1], [], []>} : vector<8x16xf32>, vector<16x32xf32>, vector<8x32xf32> -> vector<8x32xf32>
    %271 = vector.broadcast %5 : vector<1x32xf32> to vector<8x32xf32>
    %272 = arith.addf %270, %271 : vector<8x32xf32>
    %cst_135 = arith.constant 0.899999976 : f32
    %273 = vector.broadcast %cst_135 : f32 to vector<8x32xf32>
    %274 = arith.mulf %273, %237 : vector<8x32xf32>
    %275 = arith.addf %274, %272 : vector<8x32xf32>
    %cst_136 = arith.constant 1.000000e+00 : f32
    %276 = vector.broadcast %cst_136 : f32 to vector<8x32xf32>
    %277 = arith.cmpf ogt, %237, %276 : vector<8x32xf32>
    %cst_137 = arith.constant 1.000000e+00 : f32
    %278 = vector.broadcast %cst_137 : f32 to vector<8x32xf32>
    %279 = arith.subf %275, %278 : vector<8x32xf32>
    %280 = arith.select %277, %279, %275 : vector<8x32xi1>, vector<8x32xf32>
    %cst_138 = arith.constant 1.000000e+00 : f32
    %281 = vector.broadcast %cst_138 : f32 to vector<8x32xf32>
    %282 = arith.cmpf ogt, %280, %281 : vector<8x32xf32>
    %cst_139 = arith.constant 1.000000e+00 : f32
    %cst_140 = arith.constant 0.000000e+00 : f32
    %283 = vector.broadcast %cst_139 : f32 to vector<8x32xf32>
    %284 = vector.broadcast %cst_140 : f32 to vector<8x32xf32>
    %285 = arith.select %282, %283, %284 : vector<8x32xi1>, vector<8x32xf32>
    %cst_141 = arith.constant dense<0.000000e+00> : vector<8x4xf32>
    %286 = tpu.matmul %285, %4, %cst_141 {dimension_numbers = #tpu.dot_dimension_numbers<[1], [0], [0], [1], [0, 0, 1, 1], [], []>} : vector<8x32xf32>, vector<32x4xf32>, vector<8x4xf32> -> vector<8x4xf32>
    %287 = vector.broadcast %6 : vector<1x4xf32> to vector<8x4xf32>
    %288 = arith.addf %286, %287 : vector<8x4xf32>
    %cst_142 = arith.constant 0.899999976 : f32
    %289 = vector.broadcast %cst_142 : f32 to vector<8x4xf32>
    %290 = arith.mulf %289, %253 : vector<8x4xf32>
    %291 = arith.addf %290, %288 : vector<8x4xf32>
    %cst_143 = arith.constant 1.000000e+00 : f32
    %292 = vector.broadcast %cst_143 : f32 to vector<8x4xf32>
    %293 = arith.cmpf ogt, %253, %292 : vector<8x4xf32>
    %cst_144 = arith.constant 1.000000e+00 : f32
    %294 = vector.broadcast %cst_144 : f32 to vector<8x4xf32>
    %295 = arith.subf %291, %294 : vector<8x4xf32>
    %296 = arith.select %293, %295, %291 : vector<8x4xi1>, vector<8x4xf32>
    %cst_145 = arith.constant 1.000000e+00 : f32
    %297 = vector.broadcast %cst_145 : f32 to vector<8x4xf32>
    %298 = arith.cmpf ogt, %296, %297 : vector<8x4xf32>
    %cst_146 = arith.constant 1.000000e+00 : f32
    %cst_147 = arith.constant 0.000000e+00 : f32
    %299 = vector.broadcast %cst_146 : f32 to vector<8x4xf32>
    %300 = vector.broadcast %cst_147 : f32 to vector<8x4xf32>
    %301 = arith.select %298, %299, %300 : vector<8x4xi1>, vector<8x4xf32>
    %c0_148 = arith.constant 0 : index
    %302 = arith.index_cast %c6_i32 : i32 to index
    %c0_149 = arith.constant 0 : index
    %303 = vector.load %arg7[%c0_148, %302, %c0_149] : memref<8x8x4xf32, #tpu.memory_space<vmem>>, vector<8x1x4xf32>
    %304 = vector.shape_cast %303 : vector<8x1x4xf32> to vector<8x4xf32>
    %305 = vector.shape_cast %301 : vector<8x4xf32> to vector<8x1x4xf32>
    tpu.vector_store %arg7[%c0_148, %302, %c0_149], %305 {strides = array<i32>} : memref<8x8x4xf32, #tpu.memory_space<vmem>>, vector<8x1x4xf32>,
    %c0_150 = arith.constant 0 : index
    %306 = arith.index_cast %c6_i32 : i32 to index
    %c0_151 = arith.constant 0 : index
    %307 = vector.load %arg8[%c0_150, %306, %c0_151] : memref<8x8x4xf32, #tpu.memory_space<vmem>>, vector<8x1x4xf32>
    %308 = vector.shape_cast %307 : vector<8x1x4xf32> to vector<8x4xf32>
    %309 = vector.shape_cast %296 : vector<8x4xf32> to vector<8x1x4xf32>
    tpu.vector_store %arg8[%c0_150, %306, %c0_151], %309 {strides = array<i32>} : memref<8x8x4xf32, #tpu.memory_space<vmem>>, vector<8x1x4xf32>,
    %c7_i32 = arith.constant 7 : i32
    %c0_152 = arith.constant 0 : index
    %310 = arith.index_cast %c7_i32 : i32 to index
    %c0_153 = arith.constant 0 : index
    %311 = vector.load %arg2[%c0_152, %310, %c0_153] : memref<8x8x16xf32, #tpu.memory_space<vmem>>, vector<8x1x16xf32>
    %312 = vector.shape_cast %311 : vector<8x1x16xf32> to vector<8x16xf32>
    %cst_154 = arith.constant dense<0.000000e+00> : vector<8x32xf32>
    %313 = tpu.matmul %312, %3, %cst_154 {dimension_numbers = #tpu.dot_dimension_numbers<[1], [0], [0], [1], [0, 0, 1, 1], [], []>} : vector<8x16xf32>, vector<16x32xf32>, vector<8x32xf32> -> vector<8x32xf32>
    %314 = vector.broadcast %5 : vector<1x32xf32> to vector<8x32xf32>
    %315 = arith.addf %313, %314 : vector<8x32xf32>
    %cst_155 = arith.constant 0.899999976 : f32
    %316 = vector.broadcast %cst_155 : f32 to vector<8x32xf32>
    %317 = arith.mulf %316, %280 : vector<8x32xf32>
    %318 = arith.addf %317, %315 : vector<8x32xf32>
    %cst_156 = arith.constant 1.000000e+00 : f32
    %319 = vector.broadcast %cst_156 : f32 to vector<8x32xf32>
    %320 = arith.cmpf ogt, %280, %319 : vector<8x32xf32>
    %cst_157 = arith.constant 1.000000e+00 : f32
    %321 = vector.broadcast %cst_157 : f32 to vector<8x32xf32>
    %322 = arith.subf %318, %321 : vector<8x32xf32>
    %323 = arith.select %320, %322, %318 : vector<8x32xi1>, vector<8x32xf32>
    %cst_158 = arith.constant 1.000000e+00 : f32
    %324 = vector.broadcast %cst_158 : f32 to vector<8x32xf32>
    %325 = arith.cmpf ogt, %323, %324 : vector<8x32xf32>
    %cst_159 = arith.constant 1.000000e+00 : f32
    %cst_160 = arith.constant 0.000000e+00 : f32
    %326 = vector.broadcast %cst_159 : f32 to vector<8x32xf32>
    %327 = vector.broadcast %cst_160 : f32 to vector<8x32xf32>
    %328 = arith.select %325, %326, %327 : vector<8x32xi1>, vector<8x32xf32>
    %cst_161 = arith.constant dense<0.000000e+00> : vector<8x4xf32>
    %329 = tpu.matmul %328, %4, %cst_161 {dimension_numbers = #tpu.dot_dimension_numbers<[1], [0], [0], [1], [0, 0, 1, 1], [], []>} : vector<8x32xf32>, vector<32x4xf32>, vector<8x4xf32> -> vector<8x4xf32>
    %330 = vector.broadcast %6 : vector<1x4xf32> to vector<8x4xf32>
    %331 = arith.addf %329, %330 : vector<8x4xf32>
    %cst_162 = arith.constant 0.899999976 : f32
    %332 = vector.broadcast %cst_162 : f32 to vector<8x4xf32>
    %333 = arith.mulf %332, %296 : vector<8x4xf32>
    %334 = arith.addf %333, %331 : vector<8x4xf32>
    %cst_163 = arith.constant 1.000000e+00 : f32
    %335 = vector.broadcast %cst_163 : f32 to vector<8x4xf32>
    %336 = arith.cmpf ogt, %296, %335 : vector<8x4xf32>
    %cst_164 = arith.constant 1.000000e+00 : f32
    %337 = vector.broadcast %cst_164 : f32 to vector<8x4xf32>
    %338 = arith.subf %334, %337 : vector<8x4xf32>
    %339 = arith.select %336, %338, %334 : vector<8x4xi1>, vector<8x4xf32>
    %cst_165 = arith.constant 1.000000e+00 : f32
    %340 = vector.broadcast %cst_165 : f32 to vector<8x4xf32>
    %341 = arith.cmpf ogt, %339, %340 : vector<8x4xf32>
    %cst_166 = arith.constant 1.000000e+00 : f32
    %cst_167 = arith.constant 0.000000e+00 : f32
    %342 = vector.broadcast %cst_166 : f32 to vector<8x4xf32>
    %343 = vector.broadcast %cst_167 : f32 to vector<8x4xf32>
    %344 = arith.select %341, %342, %343 : vector<8x4xi1>, vector<8x4xf32>
    %c0_168 = arith.constant 0 : index
    %345 = arith.index_cast %c7_i32 : i32 to index
    %c0_169 = arith.constant 0 : index
    %346 = vector.load %arg7[%c0_168, %345, %c0_169] : memref<8x8x4xf32, #tpu.memory_space<vmem>>, vector<8x1x4xf32>
    %347 = vector.shape_cast %346 : vector<8x1x4xf32> to vector<8x4xf32>
    %348 = vector.shape_cast %344 : vector<8x4xf32> to vector<8x1x4xf32>
    tpu.vector_store %arg7[%c0_168, %345, %c0_169], %348 {strides = array<i32>} : memref<8x8x4xf32, #tpu.memory_space<vmem>>, vector<8x1x4xf32>,
    %c0_170 = arith.constant 0 : index
    %349 = arith.index_cast %c7_i32 : i32 to index
    %c0_171 = arith.constant 0 : index
    %350 = vector.load %arg8[%c0_170, %349, %c0_171] : memref<8x8x4xf32, #tpu.memory_space<vmem>>, vector<8x1x4xf32>
    %351 = vector.shape_cast %350 : vector<8x1x4xf32> to vector<8x4xf32>
    %352 = vector.shape_cast %339 : vector<8x4xf32> to vector<8x1x4xf32>
    tpu.vector_store %arg8[%c0_170, %349, %c0_171], %352 {strides = array<i32>} : memref<8x8x4xf32, #tpu.memory_space<vmem>>, vector<8x1x4xf32>,
    %c8_i32 = arith.constant 8 : i32
    %c0_172 = arith.constant 0 : index
    %c0_173 = arith.constant 0 : index
    %353 = vector.load %arg9[%c0_172, %c0_173] : memref<8x32xf32, #tpu.memory_space<vmem>>, vector<8x32xf32>
    tpu.vector_store %arg9[%c0_172, %c0_173], %323 {strides = array<i32>} : memref<8x32xf32, #tpu.memory_space<vmem>>, vector<8x32xf32>,
    %c0_174 = arith.constant 0 : index
    %c0_175 = arith.constant 0 : index
    %354 = vector.load %arg10[%c0_174, %c0_175] : memref<8x4xf32, #tpu.memory_space<vmem>>, vector<8x4xf32>
    tpu.vector_store %arg10[%c0_174, %c0_175], %339 {strides = array<i32>} : memref<8x4xf32, #tpu.memory_space<vmem>>, vector<8x4xf32>,
    return
  }
  func.func @transform_0(%arg0: i32, %arg1: i32) -> (i32, i32, i32) {
    %c0_i32 = arith.constant 0 : i32
    %c0_i32_0 = arith.constant 0 : i32
    return %arg0, %arg1, %c0_i32 : i32, i32, i32
  }
  func.func @transform_1(%arg0: i32, %arg1: i32) -> (i32, i32) {
    %c0_i32 = arith.constant 0 : i32
    %c0_i32_0 = arith.constant 0 : i32
    %c0_i32_1 = arith.constant 0 : i32
    return %c0_i32, %c0_i32_0 : i32, i32
  }
  func.func @transform_2(%arg0: i32, %arg1: i32) -> (i32, i32) {
    %c0_i32 = arith.constant 0 : i32
    %c0_i32_0 = arith.constant 0 : i32
    %c0_i32_1 = arith.constant 0 : i32
    return %c0_i32, %c0_i32_0 : i32, i32
  }
  func.func @transform_3(%arg0: i32, %arg1: i32) -> (i32, i32) {
    %c0_i32 = arith.constant 0 : i32
    %c0_i32_0 = arith.constant 0 : i32
    %c0_i32_1 = arith.constant 0 : i32
    return %c0_i32, %c0_i32_0 : i32, i32
  }
  func.func @transform_4(%arg0: i32, %arg1: i32) -> (i32, i32) {
    %c0_i32 = arith.constant 0 : i32
    %c0_i32_0 = arith.constant 0 : i32
    %c0_i32_1 = arith.constant 0 : i32
    return %c0_i32, %c0_i32_0 : i32, i32
  }
  func.func @transform_5(%arg0: i32, %arg1: i32) -> (i32, i32, i32) {
    %c0_i32 = arith.constant 0 : i32
    %c0_i32_0 = arith.constant 0 : i32
    return %arg0, %arg1, %c0_i32 : i32, i32, i32
  }
  func.func @transform_6(%arg0: i32, %arg1: i32) -> (i32, i32, i32) {
    %c0_i32 = arith.constant 0 : i32
    %c0_i32_0 = arith.constant 0 : i32
    return %arg0, %arg1, %c0_i32 : i32, i32, i32
  }
}

</mosaic_0001>

<llo_original>
// kernel: tpu_custom_call.1
$region0: #{tpu_custom_call.1}
  #allocation0 [shape = 'u32[]', space=smem, size = 0x4, offset = 0x4, fixed_abs, tag = 'smem constant byte address 0x4 - core index']
  #allocation1 [shape = 'u32[72,128]{1,0:T(1,128)}', space=vmem, size = 0x9000, scoped, tag = 'internal scratch']
  #allocation2 [shape = 'f32[8,32]{1,0:T(8,128)}', space=vmem, size = 0x1000, scoped, tag = 'scratch operand']
  #allocation3 [shape = 'f32[8,4]{1,0:T(8,128)}', space=vmem, size = 0x1000, scoped, tag = 'scratch operand']
  %s0 = inlined_call_operand.hbm [shape: f32[8,8,16], index: 0, kind: input, shape index: {}]
  %s1 = inlined_call_operand.vmem [shape: f32[16,32], index: 1, kind: input, shape index: {}]
  %s2 = inlined_call_operand.vmem [shape: f32[1,32], index: 2, kind: input, shape index: {}]
  %s3 = inlined_call_operand.vmem [shape: f32[32,4], index: 3, kind: input, shape index: {}]
  %s4 = inlined_call_operand.vmem [shape: f32[1,4], index: 4, kind: input, shape index: {}]
  %s5 = inlined_call_operand.vmem [shape: f32[8,8,4], index: 5, kind: output, shape index: {0}]
  %s6 = inlined_call_operand.vmem [shape: f32[8,8,4], index: 6, kind: output, shape index: {1}]
  %7 = xla_tuple %s5, %s6
  %s8 = sld [smem:[#allocation0]]
  $region46: #{tpu_custom_call.1} parent=0
    _
  %s10 = ssub.s32 1, %s8
  %s11 = scalar_select 0, %s10, %s8
  $region1: #{tpu_custom_call.1} parent=0
    #allocation4 [shape = 'u8[32768]{0}', space=vmem, size = 0x8000, scoped, tag = 'input window, operand 0, single buffered']
    #allocation5 [shape = 's32[1]{0}', space=sflag, size = 0x4, scoped, tag = 'scoped memory for tpu_custom_call.1']
    %12 = vsyncpa [#allocation5], 0
    // Predicated region
    $region2: #{tpu_custom_call.1} parent=1 // pred_check
      _
    $region3: #{tpu_custom_call.1} parent=1 // pred_check_branch
      %14 = sbr.rel (0) target = $region5
    $region4: #{tpu_custom_call.1} parent=1 // pred_region
      %16 = vsyncadd [#allocation5], 0
      %s17 = sshll.u32 %s0, 4
      %s18 = int_to_ptr.hbm [resolvable:$true] %s17
      %s19 = sshll.u32 [#allocation4], 4
      %s20 = int_to_ptr.vmem [resolvable:$true] %s19
      %25 = dma.hbm_to_vmem [thread:$0]  %s18, 1024, %s20, [#allocation5], 128, 128, 8
    $region5: #{tpu_custom_call.1} parent=1 // pred_fallthru
      _
    // Predicated region
    $region6: #{tpu_custom_call.1} parent=1 // pred_check
      _
    $region7: #{tpu_custom_call.1} parent=1 // pred_check_branch
      %27 = sbr.rel (0) target = $region9
    $region8: #{tpu_custom_call.1} parent=1 // pred_region
      _
    $region9: #{tpu_custom_call.1} parent=1 // pred_fallthru
      _
    // Predicated region
    $region10: #{tpu_custom_call.1} parent=1 // pred_check
      _
    $region11: #{tpu_custom_call.1} parent=1 // pred_check_branch
      %29 = sbr.rel (0) target = $region13
    $region12: #{tpu_custom_call.1} parent=1 // pred_region
      _
    $region13: #{tpu_custom_call.1} parent=1 // pred_fallthru
      _
    // Predicated region
    $region14: #{tpu_custom_call.1} parent=1 // pred_check
      _
    $region15: #{tpu_custom_call.1} parent=1 // pred_check_branch
      %31 = sbr.rel (0) target = $region17
    $region16: #{tpu_custom_call.1} parent=1 // pred_region
      _
    $region17: #{tpu_custom_call.1} parent=1 // pred_fallthru
      _
    // Predicated region
    $region18: #{tpu_custom_call.1} parent=1 // pred_check
      _
    $region19: #{tpu_custom_call.1} parent=1 // pred_check_branch
      %33 = sbr.rel (0) target = $region21
    $region20: #{tpu_custom_call.1} parent=1 // pred_region
      _
    $region21: #{tpu_custom_call.1} parent=1 // pred_fallthru
      _
    // Predicated region
    $region22: #{tpu_custom_call.1} parent=1 // pred_check
      _
    $region23: #{tpu_custom_call.1} parent=1 // pred_check_branch
      %35 = sbr.rel (0) target = $region25
    $region24: #{tpu_custom_call.1} parent=1 // pred_region
      %37 = dma.done [#allocation5], 1024
    $region25: #{tpu_custom_call.1} parent=1 // pred_fallthru
      _
    %p38 = scmp.eq.s32.totalorder 0, 0
    // Predicated region
    $region26: #{tpu_custom_call.1} parent=1 // pred_check
      %p39 = pneg %p38
    $region27: #{tpu_custom_call.1} parent=1 // pred_check_branch
      %41 = sbr.rel (%p39) target = $region29
    $region28: #{tpu_custom_call.1} parent=1 // pred_region
      %vm42 = vcmask 261120
      %43 = vst.msk [vmem:[#allocation2] sm:$0xff] %vm42, 0.0
      %vm44 = vcmask 31744
      %45 = vst.msk [vmem:[#allocation3] sm:$0xff] %vm44, 0.0
    $region29: #{tpu_custom_call.1} parent=1 // pred_fallthru
      _
    %v46 = vld [vmem:[%s1] sm:$0xff]
    %v47 = vld [vmem:[%s1 + $0x8] sm:$0xff]
    %v48 = vld [vmem:[%s3] sm:$0xff]
    %v49 = vld [vmem:[%s3 + $0x8] sm:$0xff]
    %v50 = vld [vmem:[%s3 + $0x10] sm:$0xff]
    %v51 = vld [vmem:[%s3 + $0x18] sm:$0xff]
    %v52 = vld [vmem:[%s2] sm:$0x1]
    %v53 = vld [vmem:[%s4] sm:$0x1]
    %v54 = vld [vmem:[#allocation2] sm:$0xff]
    %v55 = vld [vmem:[#allocation3] sm:$0xff]
    %v56 = vld [vmem:[#allocation4] sm:$0x1]
    %v57 = vld [vmem:[#allocation4 + $0x8] sm:$0x1]
    %v58 = vld [vmem:[#allocation4 + $0x10] sm:$0x1]
    %v59 = vld [vmem:[#allocation4 + $0x18] sm:$0x1]
    %v60 = vld [vmem:[#allocation4 + $0x20] sm:$0x1]
    %v61 = vld [vmem:[#allocation4 + $0x28] sm:$0x1]
    %v62 = vld [vmem:[#allocation4 + $0x30] sm:$0x1]
    %v63 = vld [vmem:[#allocation4 + $0x38] sm:$0x1]
    %v65 = vperm.slane %v52, 0
    %v75 = vrot.slane %v57, 7
    %vm76 = vcmask 1041409
    %v77 = vsel %vm76, %v75, %v56
    %v78 = vrot.slane %v58, 6
    %vm79 = vcmask 1042434
    %v80 = vsel %vm79, %v78, %v77
    %v81 = vrot.slane %v59, 5
    %vm82 = vcmask 1043459
    %v83 = vsel %vm82, %v81, %v80
    %v84 = vrot.slane %v60, 4
    %vm85 = vcmask 1044484
    %v86 = vsel %vm85, %v84, %v83
    %v87 = vrot.slane %v61, 3
    %vm88 = vcmask 1045509
    %v89 = vsel %vm88, %v87, %v86
    %v90 = vrot.slane %v62, 2
    %vm91 = vcmask 1046534
    %v92 = vsel %vm91, %v90, %v89
    %v93 = vrot.slane %v63, 1
    %vm94 = vcmask 1047559
    %v95 = vsel %vm94, %v93, %v92
    %vm96 = vcmask 130048
    %v97 = vsel %vm96, %v95, 0
    %99 = vmatpush.msra.mxu0 0.0
    %100 = vmatpush.msra.mxu0 0.0
    %101 = vmatpush.msra.mxu0 0.0
    %102 = vmatpush.msra.mxu0 0.0
    %103 = vmatpush.msra.mxu0 0.0
    %104 = vmatpush.msra.mxu0 0.0
    %105 = vmatpush.msra.mxu0 0.0
    %106 = vmatpush.msra.mxu0 0.0
    %107 = vmatpush.msra.mxu0 0.0
    %108 = vmatpush.msra.mxu0 0.0
    %109 = vmatpush.msra.mxu0 0.0
    %110 = vmatpush.msra.mxu0 0.0
    %111 = vmatpush.msra.mxu0 0.0
    %112 = vmatpush.msra.mxu0 0.0
    %113 = vmatpush.msra.mxu0 %v47
    %114 = vmatpush.msra.mxu0 %v46
    %115 = vmatmul.f32.gmra.mxu0 %v97
    %v116 = vpop.f32.mrf.mxu0
    %v117 = vadd.f32 %v65, %v116
    %118 = vdwg.mxu0
    %v119 = vmul.f32 %v54, 0.9
    %v120 = vadd.f32 %v119, %v117
    %vm121 = vcmp.gt.f32.partialorder %v54, 1.0
    %v122 = vsub.f32 %v120, 1.0
    %v123 = vsel %vm121, %v122, %v120
    %vm124 = vcmp.gt.f32.partialorder %v123, 1.0
    %v125 = vsel %vm124, 1.0, 0.0
    %v127 = vperm.slane %v53, 0
    %vm129 = vcmask 261120
    %v131 = vsel %vm129, %v125, 0
    %133 = vmatpush.msra.mxu0 0.0
    %134 = vmatpush.msra.mxu0 0.0
    %135 = vmatpush.msra.mxu0 0.0
    %136 = vmatpush.msra.mxu0 0.0
    %137 = vmatpush.msra.mxu0 0.0
    %138 = vmatpush.msra.mxu0 0.0
    %139 = vmatpush.msra.mxu0 0.0
    %140 = vmatpush.msra.mxu0 0.0
    %141 = vmatpush.msra.mxu0 0.0
    %142 = vmatpush.msra.mxu0 0.0
    %143 = vmatpush.msra.mxu0 0.0
    %144 = vmatpush.msra.mxu0 0.0
    %145 = vmatpush.msra.mxu0 %v51
    %146 = vmatpush.msra.mxu0 %v50
    %147 = vmatpush.msra.mxu0 %v49
    %148 = vmatpush.msra.mxu0 %v48
    %149 = vmatmul.f32.gmra.mxu0 %v131
    %v150 = vpop.f32.mrf.mxu0
    %v151 = vadd.f32 %v127, %v150
    %152 = vdwg.mxu0
    %v153 = vmul.f32 %v55, 0.9
    %v154 = vadd.f32 %v153, %v151
    %vm155 = vcmp.gt.f32.partialorder %v55, 1.0
    %v156 = vsub.f32 %v154, 1.0
    %v157 = vsel %vm155, %v156, %v154
    %vm158 = vcmp.gt.f32.partialorder %v157, 1.0
    %v159 = vsel %vm158, 1.0, 0.0
    %v161 = vrot.slane %v159, 1
    %v162 = vrot.slane %v159, 2
    %v163 = vrot.slane %v159, 3
    %v164 = vrot.slane %v159, 4
    %v165 = vrot.slane %v159, 5
    %v166 = vrot.slane %v159, 6
    %v167 = vrot.slane %v159, 7
    %vm175 = vcmask 24576
    %176 = vst.msk [vmem:[%s5] sm:$0x1] %vm175, %v159
    %177 = vst.msk [vmem:[%s5 + $0x8] sm:$0x1] %vm175, %v161
    %178 = vst.msk [vmem:[%s5 + $0x10] sm:$0x1] %vm175, %v162
    %179 = vst.msk [vmem:[%s5 + $0x18] sm:$0x1] %vm175, %v163
    %180 = vst.msk [vmem:[%s5 + $0x20] sm:$0x1] %vm175, %v164
    %181 = vst.msk [vmem:[%s5 + $0x28] sm:$0x1] %vm175, %v165
    %182 = vst.msk [vmem:[%s5 + $0x30] sm:$0x1] %vm175, %v166
    %183 = vst.msk [vmem:[%s5 + $0x38] sm:$0x1] %vm175, %v167
    %v185 = vrot.slane %v157, 1
    %v186 = vrot.slane %v157, 2
    %v187 = vrot.slane %v157, 3
    %v188 = vrot.slane %v157, 4
    %v189 = vrot.slane %v157, 5
    %v190 = vrot.slane %v157, 6
    %v191 = vrot.slane %v157, 7
    %199 = vst.msk [vmem:[%s6] sm:$0x1] %vm175, %v157
    %200 = vst.msk [vmem:[%s6 + $0x8] sm:$0x1] %vm175, %v185
    %201 = vst.msk [vmem:[%s6 + $0x10] sm:$0x1] %vm175, %v186
    %202 = vst.msk [vmem:[%s6 + $0x18] sm:$0x1] %vm175, %v187
    %203 = vst.msk [vmem:[%s6 + $0x20] sm:$0x1] %vm175, %v188
    %204 = vst.msk [vmem:[%s6 + $0x28] sm:$0x1] %vm175, %v189
    %205 = vst.msk [vmem:[%s6 + $0x30] sm:$0x1] %vm175, %v190
    %206 = vst.msk [vmem:[%s6 + $0x38] sm:$0x1] %vm175, %v191
    %v207 = vld [vmem:[#allocation4 + $0x1] sm:$0x1]
    %v208 = vld [vmem:[#allocation4 + $0x9] sm:$0x1]
    %v209 = vld [vmem:[#allocation4 + $0x11] sm:$0x1]
    %v210 = vld [vmem:[#allocation4 + $0x19] sm:$0x1]
    %v211 = vld [vmem:[#allocation4 + $0x21] sm:$0x1]
    %v212 = vld [vmem:[#allocation4 + $0x29] sm:$0x1]
    %v213 = vld [vmem:[#allocation4 + $0x31] sm:$0x1]
    %v214 = vld [vmem:[#allocation4 + $0x39] sm:$0x1]
    %v223 = vrot.slane %v208, 7
    %v224 = vsel %vm76, %v223, %v207
    %v225 = vrot.slane %v209, 6
    %v226 = vsel %vm79, %v225, %v224
    %v227 = vrot.slane %v210, 5
    %v228 = vsel %vm82, %v227, %v226
    %v229 = vrot.slane %v211, 4
    %v230 = vsel %vm85, %v229, %v228
    %v231 = vrot.slane %v212, 3
    %v232 = vsel %vm88, %v231, %v230
    %v233 = vrot.slane %v213, 2
    %v234 = vsel %vm91, %v233, %v232
    %v235 = vrot.slane %v214, 1
    %v236 = vsel %vm94, %v235, %v234
    %v237 = vsel %vm96, %v236, 0
    %239 = vmatpush.msra.mxu0 0.0
    %240 = vmatpush.msra.mxu0 0.0
    %241 = vmatpush.msra.mxu0 0.0
    %242 = vmatpush.msra.mxu0 0.0
    %243 = vmatpush.msra.mxu0 0.0
    %244 = vmatpush.msra.mxu0 0.0
    %245 = vmatpush.msra.mxu0 0.0
    %246 = vmatpush.msra.mxu0 0.0
    %247 = vmatpush.msra.mxu0 0.0
    %248 = vmatpush.msra.mxu0 0.0
    %249 = vmatpush.msra.mxu0 0.0
    %250 = vmatpush.msra.mxu0 0.0
    %251 = vmatpush.msra.mxu0 0.0
    %252 = vmatpush.msra.mxu0 0.0
    %253 = vmatpush.msra.mxu0 %v47
    %254 = vmatpush.msra.mxu0 %v46
    %255 = vmatmul.f32.gmra.mxu0 %v237
    %v256 = vpop.f32.mrf.mxu0
    %v257 = vadd.f32 %v65, %v256
    %258 = vdwg.mxu0
    %v259 = vmul.f32 %v123, 0.9
    %v260 = vadd.f32 %v259, %v257
    %v261 = vsub.f32 %v260, 1.0
    %v262 = vsel %vm124, %v261, %v260
    %vm263 = vcmp.gt.f32.partialorder %v262, 1.0
    %v264 = vsel %vm263, 1.0, 0.0
    %v266 = vsel %vm129, %v264, 0
    %268 = vmatpush.msra.mxu0 0.0
    %269 = vmatpush.msra.mxu0 0.0
    %270 = vmatpush.msra.mxu0 0.0
    %271 = vmatpush.msra.mxu0 0.0
    %272 = vmatpush.msra.mxu0 0.0
    %273 = vmatpush.msra.mxu0 0.0
    %274 = vmatpush.msra.mxu0 0.0
    %275 = vmatpush.msra.mxu0 0.0
    %276 = vmatpush.msra.mxu0 0.0
    %277 = vmatpush.msra.mxu0 0.0
    %278 = vmatpush.msra.mxu0 0.0
    %279 = vmatpush.msra.mxu0 0.0
    %280 = vmatpush.msra.mxu0 %v51
    %281 = vmatpush.msra.mxu0 %v50
    %282 = vmatpush.msra.mxu0 %v49
    %283 = vmatpush.msra.mxu0 %v48
    %284 = vmatmul.f32.gmra.mxu0 %v266
    %v285 = vpop.f32.mrf.mxu0
    %v286 = vadd.f32 %v127, %v285
    %287 = vdwg.mxu0
    %v288 = vmul.f32 %v157, 0.9
    %v289 = vadd.f32 %v288, %v286
    %v290 = vsub.f32 %v289, 1.0
    %v291 = vsel %vm158, %v290, %v289
    %vm292 = vcmp.gt.f32.partialorder %v291, 1.0
    %v293 = vsel %vm292, 1.0, 0.0
    %v295 = vrot.slane %v293, 1
    %v296 = vrot.slane %v293, 2
    %v297 = vrot.slane %v293, 3
    %v298 = vrot.slane %v293, 4
    %v299 = vrot.slane %v293, 5
    %v300 = vrot.slane %v293, 6
    %v301 = vrot.slane %v293, 7
    %309 = vst.msk [vmem:[%s5 + $0x1] sm:$0x1] %vm175, %v293
    %310 = vst.msk [vmem:[%s5 + $0x9] sm:$0x1] %vm175, %v295
    %311 = vst.msk [vmem:[%s5 + $0x11] sm:$0x1] %vm175, %v296
    %312 = vst.msk [vmem:[%s5 + $0x19] sm:$0x1] %vm175, %v297
    %313 = vst.msk [vmem:[%s5 + $0x21] sm:$0x1] %vm175, %v298
    %314 = vst.msk [vmem:[%s5 + $0x29] sm:$0x1] %vm175, %v299
    %315 = vst.msk [vmem:[%s5 + $0x31] sm:$0x1] %vm175, %v300
    %316 = vst.msk [vmem:[%s5 + $0x39] sm:$0x1] %vm175, %v301
    %v318 = vrot.slane %v291, 1
    %v319 = vrot.slane %v291, 2
    %v320 = vrot.slane %v291, 3
    %v321 = vrot.slane %v291, 4
    %v322 = vrot.slane %v291, 5
    %v323 = vrot.slane %v291, 6
    %v324 = vrot.slane %v291, 7
    %332 = vst.msk [vmem:[%s6 + $0x1] sm:$0x1] %vm175, %v291
    %333 = vst.msk [vmem:[%s6 + $0x9] sm:$0x1] %vm175, %v318
    %334 = vst.msk [vmem:[%s6 + $0x11] sm:$0x1] %vm175, %v319
    %335 = vst.msk [vmem:[%s6 + $0x19] sm:$0x1] %vm175, %v320
    %336 = vst.msk [vmem:[%s6 + $0x21] sm:$0x1] %vm175, %v321
    %337 = vst.msk [vmem:[%s6 + $0x29] sm:$0x1] %vm175, %v322
    %338 = vst.msk [vmem:[%s6 + $0x31] sm:$0x1] %vm175, %v323
    %339 = vst.msk [vmem:[%s6 + $0x39] sm:$0x1] %vm175, %v324
    %v340 = vld [vmem:[#allocation4 + $0x2] sm:$0x1]
    %v341 = vld [vmem:[#allocation4 + $0xa] sm:$0x1]
    %v342 = vld [vmem:[#allocation4 + $0x12] sm:$0x1]
    %v343 = vld [vmem:[#allocation4 + $0x1a] sm:$0x1]
    %v344 = vld [vmem:[#allocation4 + $0x22] sm:$0x1]
    %v345 = vld [vmem:[#allocation4 + $0x2a] sm:$0x1]
    %v346 = vld [vmem:[#allocation4 + $0x32] sm:$0x1]
    %v347 = vld [vmem:[#allocation4 + $0x3a] sm:$0x1]
    %v356 = vrot.slane %v341, 7
    %v357 = vsel %vm76, %v356, %v340
    %v358 = vrot.slane %v342, 6
    %v359 = vsel %vm79, %v358, %v357
    %v360 = vrot.slane %v343, 5
    %v361 = vsel %vm82, %v360, %v359
    %v362 = vrot.slane %v344, 4
    %v363 = vsel %vm85, %v362, %v361
    %v364 = vrot.slane %v345, 3
    %v365 = vsel %vm88, %v364, %v363
    %v366 = vrot.slane %v346, 2
    %v367 = vsel %vm91, %v366, %v365
    %v368 = vrot.slane %v347, 1
    %v369 = vsel %vm94, %v368, %v367
    %v370 = vsel %vm96, %v369, 0
    %372 = vmatpush.msra.mxu0 0.0
    %373 = vmatpush.msra.mxu0 0.0
    %374 = vmatpush.msra.mxu0 0.0
    %375 = vmatpush.msra.mxu0 0.0
    %376 = vmatpush.msra.mxu0 0.0
    %377 = vmatpush.msra.mxu0 0.0
    %378 = vmatpush.msra.mxu0 0.0
    %379 = vmatpush.msra.mxu0 0.0
    %380 = vmatpush.msra.mxu0 0.0
    %381 = vmatpush.msra.mxu0 0.0
    %382 = vmatpush.msra.mxu0 0.0
    %383 = vmatpush.msra.mxu0 0.0
    %384 = vmatpush.msra.mxu0 0.0
    %385 = vmatpush.msra.mxu0 0.0
    %386 = vmatpush.msra.mxu0 %v47
    %387 = vmatpush.msra.mxu0 %v46
    %388 = vmatmul.f32.gmra.mxu0 %v370
    %v389 = vpop.f32.mrf.mxu0
    %v390 = vadd.f32 %v65, %v389
    %391 = vdwg.mxu0
    %v392 = vmul.f32 %v262, 0.9
    %v393 = vadd.f32 %v392, %v390
    %v394 = vsub.f32 %v393, 1.0
    %v395 = vsel %vm263, %v394, %v393
    %vm396 = vcmp.gt.f32.partialorder %v395, 1.0
    %v397 = vsel %vm396, 1.0, 0.0
    %v399 = vsel %vm129, %v397, 0
    %401 = vmatpush.msra.mxu0 0.0
    %402 = vmatpush.msra.mxu0 0.0
    %403 = vmatpush.msra.mxu0 0.0
    %404 = vmatpush.msra.mxu0 0.0
    %405 = vmatpush.msra.mxu0 0.0
    %406 = vmatpush.msra.mxu0 0.0
    %407 = vmatpush.msra.mxu0 0.0
    %408 = vmatpush.msra.mxu0 0.0
    %409 = vmatpush.msra.mxu0 0.0
    %410 = vmatpush.msra.mxu0 0.0
    %411 = vmatpush.msra.mxu0 0.0
    %412 = vmatpush.msra.mxu0 0.0
    %413 = vmatpush.msra.mxu0 %v51
    %414 = vmatpush.msra.mxu0 %v50
    %415 = vmatpush.msra.mxu0 %v49
    %416 = vmatpush.msra.mxu0 %v48
    %417 = vmatmul.f32.gmra.mxu0 %v399
    %v418 = vpop.f32.mrf.mxu0
    %v419 = vadd.f32 %v127, %v418
    %420 = vdwg.mxu0
    %v421 = vmul.f32 %v291, 0.9
    %v422 = vadd.f32 %v421, %v419
    %v423 = vsub.f32 %v422, 1.0
    %v424 = vsel %vm292, %v423, %v422
    %vm425 = vcmp.gt.f32.partialorder %v424, 1.0
    %v426 = vsel %vm425, 1.0, 0.0
    %v428 = vrot.slane %v426, 1
    %v429 = vrot.slane %v426, 2
    %v430 = vrot.slane %v426, 3
    %v431 = vrot.slane %v426, 4
    %v432 = vrot.slane %v426, 5
    %v433 = vrot.slane %v426, 6
    %v434 = vrot.slane %v426, 7
    %442 = vst.msk [vmem:[%s5 + $0x2] sm:$0x1] %vm175, %v426
    %443 = vst.msk [vmem:[%s5 + $0xa] sm:$0x1] %vm175, %v428
    %444 = vst.msk [vmem:[%s5 + $0x12] sm:$0x1] %vm175, %v429
    %445 = vst.msk [vmem:[%s5 + $0x1a] sm:$0x1] %vm175, %v430
    %446 = vst.msk [vmem:[%s5 + $0x22] sm:$0x1] %vm175, %v431
    %447 = vst.msk [vmem:[%s5 + $0x2a] sm:$0x1] %vm175, %v432
    %448 = vst.msk [vmem:[%s5 + $0x32] sm:$0x1] %vm175, %v433
    %449 = vst.msk [vmem:[%s5 + $0x3a] sm:$0x1] %vm175, %v434
    %v451 = vrot.slane %v424, 1
    %v452 = vrot.slane %v424, 2
    %v453 = vrot.slane %v424, 3
    %v454 = vrot.slane %v424, 4
    %v455 = vrot.slane %v424, 5
    %v456 = vrot.slane %v424, 6
    %v457 = vrot.slane %v424, 7
    %465 = vst.msk [vmem:[%s6 + $0x2] sm:$0x1] %vm175, %v424
    %466 = vst.msk [vmem:[%s6 + $0xa] sm:$0x1] %vm175, %v451
    %467 = vst.msk [vmem:[%s6 + $0x12] sm:$0x1] %vm175, %v452
    %468 = vst.msk [vmem:[%s6 + $0x1a] sm:$0x1] %vm175, %v453
    %469 = vst.msk [vmem:[%s6 + $0x22] sm:$0x1] %vm175, %v454
    %470 = vst.msk [vmem:[%s6 + $0x2a] sm:$0x1] %vm175, %v455
    %471 = vst.msk [vmem:[%s6 + $0x32] sm:$0x1] %vm175, %v456
    %472 = vst.msk [vmem:[%s6 + $0x3a] sm:$0x1] %vm175, %v457
    %v473 = vld [vmem:[#allocation4 + $0x3] sm:$0x1]
    %v474 = vld [vmem:[#allocation4 + $0xb] sm:$0x1]
    %v475 = vld [vmem:[#allocation4 + $0x13] sm:$0x1]
    %v476 = vld [vmem:[#allocation4 + $0x1b] sm:$0x1]
    %v477 = vld [vmem:[#allocation4 + $0x23] sm:$0x1]
    %v478 = vld [vmem:[#allocation4 + $0x2b] sm:$0x1]
    %v479 = vld [vmem:[#allocation4 + $0x33] sm:$0x1]
    %v480 = vld [vmem:[#allocation4 + $0x3b] sm:$0x1]
    %v489 = vrot.slane %v474, 7
    %v490 = vsel %vm76, %v489, %v473
    %v491 = vrot.slane %v475, 6
    %v492 = vsel %vm79, %v491, %v490
    %v493 = vrot.slane %v476, 5
    %v494 = vsel %vm82, %v493, %v492
    %v495 = vrot.slane %v477, 4
    %v496 = vsel %vm85, %v495, %v494
    %v497 = vrot.slane %v478, 3
    %v498 = vsel %vm88, %v497, %v496
    %v499 = vrot.slane %v479, 2
    %v500 = vsel %vm91, %v499, %v498
    %v501 = vrot.slane %v480, 1
    %v502 = vsel %vm94, %v501, %v500
    %v503 = vsel %vm96, %v502, 0
    %505 = vmatpush.msra.mxu0 0.0
    %506 = vmatpush.msra.mxu0 0.0
    %507 = vmatpush.msra.mxu0 0.0
    %508 = vmatpush.msra.mxu0 0.0
    %509 = vmatpush.msra.mxu0 0.0
    %510 = vmatpush.msra.mxu0 0.0
    %511 = vmatpush.msra.mxu0 0.0
    %512 = vmatpush.msra.mxu0 0.0
    %513 = vmatpush.msra.mxu0 0.0
    %514 = vmatpush.msra.mxu0 0.0
    %515 = vmatpush.msra.mxu0 0.0
    %516 = vmatpush.msra.mxu0 0.0
    %517 = vmatpush.msra.mxu0 0.0
    %518 = vmatpush.msra.mxu0 0.0
    %519 = vmatpush.msra.mxu0 %v47
    %520 = vmatpush.msra.mxu0 %v46
    %521 = vmatmul.f32.gmra.mxu0 %v503
    %v522 = vpop.f32.mrf.mxu0
    %v523 = vadd.f32 %v65, %v522
    %524 = vdwg.mxu0
    %v525 = vmul.f32 %v395, 0.9
    %v526 = vadd.f32 %v525, %v523
    %v527 = vsub.f32 %v526, 1.0
    %v528 = vsel %vm396, %v527, %v526
    %vm529 = vcmp.gt.f32.partialorder %v528, 1.0
    %v530 = vsel %vm529, 1.0, 0.0
    %v532 = vsel %vm129, %v530, 0
    %534 = vmatpush.msra.mxu0 0.0
    %535 = vmatpush.msra.mxu0 0.0
    %536 = vmatpush.msra.mxu0 0.0
    %537 = vmatpush.msra.mxu0 0.0
    %538 = vmatpush.msra.mxu0 0.0
    %539 = vmatpush.msra.mxu0 0.0
    %540 = vmatpush.msra.mxu0 0.0
    %541 = vmatpush.msra.mxu0 0.0
    %542 = vmatpush.msra.mxu0 0.0
    %543 = vmatpush.msra.mxu0 0.0
    %544 = vmatpush.msra.mxu0 0.0
    %545 = vmatpush.msra.mxu0 0.0
    %546 = vmatpush.msra.mxu0 %v51
    %547 = vmatpush.msra.mxu0 %v50
    %548 = vmatpush.msra.mxu0 %v49
    %549 = vmatpush.msra.mxu0 %v48
    %550 = vmatmul.f32.gmra.mxu0 %v532
    %v551 = vpop.f32.mrf.mxu0
    %v552 = vadd.f32 %v127, %v551
    %553 = vdwg.mxu0
    %v554 = vmul.f32 %v424, 0.9
    %v555 = vadd.f32 %v554, %v552
    %v556 = vsub.f32 %v555, 1.0
    %v557 = vsel %vm425, %v556, %v555
    %vm558 = vcmp.gt.f32.partialorder %v557, 1.0
    %v559 = vsel %vm558, 1.0, 0.0
    %v561 = vrot.slane %v559, 1
    %v562 = vrot.slane %v559, 2
    %v563 = vrot.slane %v559, 3
    %v564 = vrot.slane %v559, 4
    %v565 = vrot.slane %v559, 5
    %v566 = vrot.slane %v559, 6
    %v567 = vrot.slane %v559, 7
    %575 = vst.msk [vmem:[%s5 + $0x3] sm:$0x1] %vm175, %v559
    %576 = vst.msk [vmem:[%s5 + $0xb] sm:$0x1] %vm175, %v561
    %577 = vst.msk [vmem:[%s5 + $0x13] sm:$0x1] %vm175, %v562
    %578 = vst.msk [vmem:[%s5 + $0x1b] sm:$0x1] %vm175, %v563
    %579 = vst.msk [vmem:[%s5 + $0x23] sm:$0x1] %vm175, %v564
    %580 = vst.msk [vmem:[%s5 + $0x2b] sm:$0x1] %vm175, %v565
    %581 = vst.msk [vmem:[%s5 + $0x33] sm:$0x1] %vm175, %v566
    %582 = vst.msk [vmem:[%s5 + $0x3b] sm:$0x1] %vm175, %v567
    %v584 = vrot.slane %v557, 1
    %v585 = vrot.slane %v557, 2
    %v586 = vrot.slane %v557, 3
    %v587 = vrot.slane %v557, 4
    %v588 = vrot.slane %v557, 5
    %v589 = vrot.slane %v557, 6
    %v590 = vrot.slane %v557, 7
    %598 = vst.msk [vmem:[%s6 + $0x3] sm:$0x1] %vm175, %v557
    %599 = vst.msk [vmem:[%s6 + $0xb] sm:$0x1] %vm175, %v584
    %600 = vst.msk [vmem:[%s6 + $0x13] sm:$0x1] %vm175, %v585
    %601 = vst.msk [vmem:[%s6 + $0x1b] sm:$0x1] %vm175, %v586
    %602 = vst.msk [vmem:[%s6 + $0x23] sm:$0x1] %vm175, %v587
    %603 = vst.msk [vmem:[%s6 + $0x2b] sm:$0x1] %vm175, %v588
    %604 = vst.msk [vmem:[%s6 + $0x33] sm:$0x1] %vm175, %v589
    %605 = vst.msk [vmem:[%s6 + $0x3b] sm:$0x1] %vm175, %v590
    %v606 = vld [vmem:[#allocation4 + $0x4] sm:$0x1]
    %v607 = vld [vmem:[#allocation4 + $0xc] sm:$0x1]
    %v608 = vld [vmem:[#allocation4 + $0x14] sm:$0x1]
    %v609 = vld [vmem:[#allocation4 + $0x1c] sm:$0x1]
    %v610 = vld [vmem:[#allocation4 + $0x24] sm:$0x1]
    %v611 = vld [vmem:[#allocation4 + $0x2c] sm:$0x1]
    %v612 = vld [vmem:[#allocation4 + $0x34] sm:$0x1]
    %v613 = vld [vmem:[#allocation4 + $0x3c] sm:$0x1]
    %v622 = vrot.slane %v607, 7
    %v623 = vsel %vm76, %v622, %v606
    %v624 = vrot.slane %v608, 6
    %v625 = vsel %vm79, %v624, %v623
    %v626 = vrot.slane %v609, 5
    %v627 = vsel %vm82, %v626, %v625
    %v628 = vrot.slane %v610, 4
    %v629 = vsel %vm85, %v628, %v627
    %v630 = vrot.slane %v611, 3
    %v631 = vsel %vm88, %v630, %v629
    %v632 = vrot.slane %v612, 2
    %v633 = vsel %vm91, %v632, %v631
    %v634 = vrot.slane %v613, 1
    %v635 = vsel %vm94, %v634, %v633
    %v636 = vsel %vm96, %v635, 0
    %638 = vmatpush.msra.mxu0 0.0
    %639 = vmatpush.msra.mxu0 0.0
    %640 = vmatpush.msra.mxu0 0.0
    %641 = vmatpush.msra.mxu0 0.0
    %642 = vmatpush.msra.mxu0 0.0
    %643 = vmatpush.msra.mxu0 0.0
    %644 = vmatpush.msra.mxu0 0.0
    %645 = vmatpush.msra.mxu0 0.0
    %646 = vmatpush.msra.mxu0 0.0
    %647 = vmatpush.msra.mxu0 0.0
    %648 = vmatpush.msra.mxu0 0.0
    %649 = vmatpush.msra.mxu0 0.0
    %650 = vmatpush.msra.mxu0 0.0
    %651 = vmatpush.msra.mxu0 0.0
    %652 = vmatpush.msra.mxu0 %v47
    %653 = vmatpush.msra.mxu0 %v46
    %654 = vmatmul.f32.gmra.mxu0 %v636
    %v655 = vpop.f32.mrf.mxu0
    %v656 = vadd.f32 %v65, %v655
    %657 = vdwg.mxu0
    %v658 = vmul.f32 %v528, 0.9
    %v659 = vadd.f32 %v658, %v656
    %v660 = vsub.f32 %v659, 1.0
    %v661 = vsel %vm529, %v660, %v659
    %vm662 = vcmp.gt.f32.partialorder %v661, 1.0
    %v663 = vsel %vm662, 1.0, 0.0
    %v665 = vsel %vm129, %v663, 0
    %667 = vmatpush.msra.mxu0 0.0
    %668 = vmatpush.msra.mxu0 0.0
    %669 = vmatpush.msra.mxu0 0.0
    %670 = vmatpush.msra.mxu0 0.0
    %671 = vmatpush.msra.mxu0 0.0
    %672 = vmatpush.msra.mxu0 0.0
    %673 = vmatpush.msra.mxu0 0.0
    %674 = vmatpush.msra.mxu0 0.0
    %675 = vmatpush.msra.mxu0 0.0
    %676 = vmatpush.msra.mxu0 0.0
    %677 = vmatpush.msra.mxu0 0.0
    %678 = vmatpush.msra.mxu0 0.0
    %679 = vmatpush.msra.mxu0 %v51
    %680 = vmatpush.msra.mxu0 %v50
    %681 = vmatpush.msra.mxu0 %v49
    %682 = vmatpush.msra.mxu0 %v48
    %683 = vmatmul.f32.gmra.mxu0 %v665
    %v684 = vpop.f32.mrf.mxu0
    %v685 = vadd.f32 %v127, %v684
    %686 = vdwg.mxu0
    %v687 = vmul.f32 %v557, 0.9
    %v688 = vadd.f32 %v687, %v685
    %v689 = vsub.f32 %v688, 1.0
    %v690 = vsel %vm558, %v689, %v688
    %vm691 = vcmp.gt.f32.partialorder %v690, 1.0
    %v692 = vsel %vm691, 1.0, 0.0
    %v694 = vrot.slane %v692, 1
    %v695 = vrot.slane %v692, 2
    %v696 = vrot.slane %v692, 3
    %v697 = vrot.slane %v692, 4
    %v698 = vrot.slane %v692, 5
    %v699 = vrot.slane %v692, 6
    %v700 = vrot.slane %v692, 7
    %708 = vst.msk [vmem:[%s5 + $0x4] sm:$0x1] %vm175, %v692
    %709 = vst.msk [vmem:[%s5 + $0xc] sm:$0x1] %vm175, %v694
    %710 = vst.msk [vmem:[%s5 + $0x14] sm:$0x1] %vm175, %v695
    %711 = vst.msk [vmem:[%s5 + $0x1c] sm:$0x1] %vm175, %v696
    %712 = vst.msk [vmem:[%s5 + $0x24] sm:$0x1] %vm175, %v697
    %713 = vst.msk [vmem:[%s5 + $0x2c] sm:$0x1] %vm175, %v698
    %714 = vst.msk [vmem:[%s5 + $0x34] sm:$0x1] %vm175, %v699
    %715 = vst.msk [vmem:[%s5 + $0x3c] sm:$0x1] %vm175, %v700
    %v717 = vrot.slane %v690, 1
    %v718 = vrot.slane %v690, 2
    %v719 = vrot.slane %v690, 3
    %v720 = vrot.slane %v690, 4
    %v721 = vrot.slane %v690, 5
    %v722 = vrot.slane %v690, 6
    %v723 = vrot.slane %v690, 7
    %731 = vst.msk [vmem:[%s6 + $0x4] sm:$0x1] %vm175, %v690
    %732 = vst.msk [vmem:[%s6 + $0xc] sm:$0x1] %vm175, %v717
    %733 = vst.msk [vmem:[%s6 + $0x14] sm:$0x1] %vm175, %v718
    %734 = vst.msk [vmem:[%s6 + $0x1c] sm:$0x1] %vm175, %v719
    %735 = vst.msk [vmem:[%s6 + $0x24] sm:$0x1] %vm175, %v720
    %736 = vst.msk [vmem:[%s6 + $0x2c] sm:$0x1] %vm175, %v721
    %737 = vst.msk [vmem:[%s6 + $0x34] sm:$0x1] %vm175, %v722
    %738 = vst.msk [vmem:[%s6 + $0x3c] sm:$0x1] %vm175, %v723
    %v739 = vld [vmem:[#allocation4 + $0x5] sm:$0x1]
    %v740 = vld [vmem:[#allocation4 + $0xd] sm:$0x1]
    %v741 = vld [vmem:[#allocation4 + $0x15] sm:$0x1]
    %v742 = vld [vmem:[#allocation4 + $0x1d] sm:$0x1]
    %v743 = vld [vmem:[#allocation4 + $0x25] sm:$0x1]
    %v744 = vld [vmem:[#allocation4 + $0x2d] sm:$0x1]
    %v745 = vld [vmem:[#allocation4 + $0x35] sm:$0x1]
    %v746 = vld [vmem:[#allocation4 + $0x3d] sm:$0x1]
    %v755 = vrot.slane %v740, 7
    %v756 = vsel %vm76, %v755, %v739
    %v757 = vrot.slane %v741, 6
    %v758 = vsel %vm79, %v757, %v756
    %v759 = vrot.slane %v742, 5
    %v760 = vsel %vm82, %v759, %v758
    %v761 = vrot.slane %v743, 4
    %v762 = vsel %vm85, %v761, %v760
    %v763 = vrot.slane %v744, 3
    %v764 = vsel %vm88, %v763, %v762
    %v765 = vrot.slane %v745, 2
    %v766 = vsel %vm91, %v765, %v764
    %v767 = vrot.slane %v746, 1
    %v768 = vsel %vm94, %v767, %v766
    %v769 = vsel %vm96, %v768, 0
    %771 = vmatpush.msra.mxu0 0.0
    %772 = vmatpush.msra.mxu0 0.0
    %773 = vmatpush.msra.mxu0 0.0
    %774 = vmatpush.msra.mxu0 0.0
    %775 = vmatpush.msra.mxu0 0.0
    %776 = vmatpush.msra.mxu0 0.0
    %777 = vmatpush.msra.mxu0 0.0
    %778 = vmatpush.msra.mxu0 0.0
    %779 = vmatpush.msra.mxu0 0.0
    %780 = vmatpush.msra.mxu0 0.0
    %781 = vmatpush.msra.mxu0 0.0
    %782 = vmatpush.msra.mxu0 0.0
    %783 = vmatpush.msra.mxu0 0.0
    %784 = vmatpush.msra.mxu0 0.0
    %785 = vmatpush.msra.mxu0 %v47
    %786 = vmatpush.msra.mxu0 %v46
    %787 = vmatmul.f32.gmra.mxu0 %v769
    %v788 = vpop.f32.mrf.mxu0
    %v789 = vadd.f32 %v65, %v788
    %790 = vdwg.mxu0
    %v791 = vmul.f32 %v661, 0.9
    %v792 = vadd.f32 %v791, %v789
    %v793 = vsub.f32 %v792, 1.0
    %v794 = vsel %vm662, %v793, %v792
    %vm795 = vcmp.gt.f32.partialorder %v794, 1.0
    %v796 = vsel %vm795, 1.0, 0.0
    %v798 = vsel %vm129, %v796, 0
    %800 = vmatpush.msra.mxu0 0.0
    %801 = vmatpush.msra.mxu0 0.0
    %802 = vmatpush.msra.mxu0 0.0
    %803 = vmatpush.msra.mxu0 0.0
    %804 = vmatpush.msra.mxu0 0.0
    %805 = vmatpush.msra.mxu0 0.0
    %806 = vmatpush.msra.mxu0 0.0
    %807 = vmatpush.msra.mxu0 0.0
    %808 = vmatpush.msra.mxu0 0.0
    %809 = vmatpush.msra.mxu0 0.0
    %810 = vmatpush.msra.mxu0 0.0
    %811 = vmatpush.msra.mxu0 0.0
    %812 = vmatpush.msra.mxu0 %v51
    %813 = vmatpush.msra.mxu0 %v50
    %814 = vmatpush.msra.mxu0 %v49
    %815 = vmatpush.msra.mxu0 %v48
    %816 = vmatmul.f32.gmra.mxu0 %v798
    %v817 = vpop.f32.mrf.mxu0
    %v818 = vadd.f32 %v127, %v817
    %819 = vdwg.mxu0
    %v820 = vmul.f32 %v690, 0.9
    %v821 = vadd.f32 %v820, %v818
    %v822 = vsub.f32 %v821, 1.0
    %v823 = vsel %vm691, %v822, %v821
    %vm824 = vcmp.gt.f32.partialorder %v823, 1.0
    %v825 = vsel %vm824, 1.0, 0.0
    %v827 = vrot.slane %v825, 1
    %v828 = vrot.slane %v825, 2
    %v829 = vrot.slane %v825, 3
    %v830 = vrot.slane %v825, 4
    %v831 = vrot.slane %v825, 5
    %v832 = vrot.slane %v825, 6
    %v833 = vrot.slane %v825, 7
    %841 = vst.msk [vmem:[%s5 + $0x5] sm:$0x1] %vm175, %v825
    %842 = vst.msk [vmem:[%s5 + $0xd] sm:$0x1] %vm175, %v827
    %843 = vst.msk [vmem:[%s5 + $0x15] sm:$0x1] %vm175, %v828
    %844 = vst.msk [vmem:[%s5 + $0x1d] sm:$0x1] %vm175, %v829
    %845 = vst.msk [vmem:[%s5 + $0x25] sm:$0x1] %vm175, %v830
    %846 = vst.msk [vmem:[%s5 + $0x2d] sm:$0x1] %vm175, %v831
    %847 = vst.msk [vmem:[%s5 + $0x35] sm:$0x1] %vm175, %v832
    %848 = vst.msk [vmem:[%s5 + $0x3d] sm:$0x1] %vm175, %v833
    %v850 = vrot.slane %v823, 1
    %v851 = vrot.slane %v823, 2
    %v852 = vrot.slane %v823, 3
    %v853 = vrot.slane %v823, 4
    %v854 = vrot.slane %v823, 5
    %v855 = vrot.slane %v823, 6
    %v856 = vrot.slane %v823, 7
    %864 = vst.msk [vmem:[%s6 + $0x5] sm:$0x1] %vm175, %v823
    %865 = vst.msk [vmem:[%s6 + $0xd] sm:$0x1] %vm175, %v850
    %866 = vst.msk [vmem:[%s6 + $0x15] sm:$0x1] %vm175, %v851
    %867 = vst.msk [vmem:[%s6 + $0x1d] sm:$0x1] %vm175, %v852
    %868 = vst.msk [vmem:[%s6 + $0x25] sm:$0x1] %vm175, %v853
    %869 = vst.msk [vmem:[%s6 + $0x2d] sm:$0x1] %vm175, %v854
    %870 = vst.msk [vmem:[%s6 + $0x35] sm:$0x1] %vm175, %v855
    %871 = vst.msk [vmem:[%s6 + $0x3d] sm:$0x1] %vm175, %v856
    %v872 = vld [vmem:[#allocation4 + $0x6] sm:$0x1]
    %v873 = vld [vmem:[#allocation4 + $0xe] sm:$0x1]
    %v874 = vld [vmem:[#allocation4 + $0x16] sm:$0x1]
    %v875 = vld [vmem:[#allocation4 + $0x1e] sm:$0x1]
    %v876 = vld [vmem:[#allocation4 + $0x26] sm:$0x1]
    %v877 = vld [vmem:[#allocation4 + $0x2e] sm:$0x1]
    %v878 = vld [vmem:[#allocation4 + $0x36] sm:$0x1]
    %v879 = vld [vmem:[#allocation4 + $0x3e] sm:$0x1]
    %v888 = vrot.slane %v873, 7
    %v889 = vsel %vm76, %v888, %v872
    %v890 = vrot.slane %v874, 6
    %v891 = vsel %vm79, %v890, %v889
    %v892 = vrot.slane %v875, 5
    %v893 = vsel %vm82, %v892, %v891
    %v894 = vrot.slane %v876, 4
    %v895 = vsel %vm85, %v894, %v893
    %v896 = vrot.slane %v877, 3
    %v897 = vsel %vm88, %v896, %v895
    %v898 = vrot.slane %v878, 2
    %v899 = vsel %vm91, %v898, %v897
    %v900 = vrot.slane %v879, 1
    %v901 = vsel %vm94, %v900, %v899
    %v902 = vsel %vm96, %v901, 0
    %904 = vmatpush.msra.mxu0 0.0
    %905 = vmatpush.msra.mxu0 0.0
    %906 = vmatpush.msra.mxu0 0.0
    %907 = vmatpush.msra.mxu0 0.0
    %908 = vmatpush.msra.mxu0 0.0
    %909 = vmatpush.msra.mxu0 0.0
    %910 = vmatpush.msra.mxu0 0.0
    %911 = vmatpush.msra.mxu0 0.0
    %912 = vmatpush.msra.mxu0 0.0
    %913 = vmatpush.msra.mxu0 0.0
    %914 = vmatpush.msra.mxu0 0.0
    %915 = vmatpush.msra.mxu0 0.0
    %916 = vmatpush.msra.mxu0 0.0
    %917 = vmatpush.msra.mxu0 0.0
    %918 = vmatpush.msra.mxu0 %v47
    %919 = vmatpush.msra.mxu0 %v46
    %920 = vmatmul.f32.gmra.mxu0 %v902
    %v921 = vpop.f32.mrf.mxu0
    %v922 = vadd.f32 %v65, %v921
    %923 = vdwg.mxu0
    %v924 = vmul.f32 %v794, 0.9
    %v925 = vadd.f32 %v924, %v922
    %v926 = vsub.f32 %v925, 1.0
    %v927 = vsel %vm795, %v926, %v925
    %vm928 = vcmp.gt.f32.partialorder %v927, 1.0
    %v929 = vsel %vm928, 1.0, 0.0
    %v931 = vsel %vm129, %v929, 0
    %933 = vmatpush.msra.mxu0 0.0
    %934 = vmatpush.msra.mxu0 0.0
    %935 = vmatpush.msra.mxu0 0.0
    %936 = vmatpush.msra.mxu0 0.0
    %937 = vmatpush.msra.mxu0 0.0
    %938 = vmatpush.msra.mxu0 0.0
    %939 = vmatpush.msra.mxu0 0.0
    %940 = vmatpush.msra.mxu0 0.0
    %941 = vmatpush.msra.mxu0 0.0
    %942 = vmatpush.msra.mxu0 0.0
    %943 = vmatpush.msra.mxu0 0.0
    %944 = vmatpush.msra.mxu0 0.0
    %945 = vmatpush.msra.mxu0 %v51
    %946 = vmatpush.msra.mxu0 %v50
    %947 = vmatpush.msra.mxu0 %v49
    %948 = vmatpush.msra.mxu0 %v48
    %949 = vmatmul.f32.gmra.mxu0 %v931
    %v950 = vpop.f32.mrf.mxu0
    %v951 = vadd.f32 %v127, %v950
    %952 = vdwg.mxu0
    %v953 = vmul.f32 %v823, 0.9
    %v954 = vadd.f32 %v953, %v951
    %v955 = vsub.f32 %v954, 1.0
    %v956 = vsel %vm824, %v955, %v954
    %vm957 = vcmp.gt.f32.partialorder %v956, 1.0
    %v958 = vsel %vm957, 1.0, 0.0
    %v960 = vrot.slane %v958, 1
    %v961 = vrot.slane %v958, 2
    %v962 = vrot.slane %v958, 3
    %v963 = vrot.slane %v958, 4
    %v964 = vrot.slane %v958, 5
    %v965 = vrot.slane %v958, 6
    %v966 = vrot.slane %v958, 7
    %974 = vst.msk [vmem:[%s5 + $0x6] sm:$0x1] %vm175, %v958
    %975 = vst.msk [vmem:[%s5 + $0xe] sm:$0x1] %vm175, %v960
    %976 = vst.msk [vmem:[%s5 + $0x16] sm:$0x1] %vm175, %v961
    %977 = vst.msk [vmem:[%s5 + $0x1e] sm:$0x1] %vm175, %v962
    %978 = vst.msk [vmem:[%s5 + $0x26] sm:$0x1] %vm175, %v963
    %979 = vst.msk [vmem:[%s5 + $0x2e] sm:$0x1] %vm175, %v964
    %980 = vst.msk [vmem:[%s5 + $0x36] sm:$0x1] %vm175, %v965
    %981 = vst.msk [vmem:[%s5 + $0x3e] sm:$0x1] %vm175, %v966
    %v983 = vrot.slane %v956, 1
    %v984 = vrot.slane %v956, 2
    %v985 = vrot.slane %v956, 3
    %v986 = vrot.slane %v956, 4
    %v987 = vrot.slane %v956, 5
    %v988 = vrot.slane %v956, 6
    %v989 = vrot.slane %v956, 7
    %997 = vst.msk [vmem:[%s6 + $0x6] sm:$0x1] %vm175, %v956
    %998 = vst.msk [vmem:[%s6 + $0xe] sm:$0x1] %vm175, %v983
    %999 = vst.msk [vmem:[%s6 + $0x16] sm:$0x1] %vm175, %v984
    %1000 = vst.msk [vmem:[%s6 + $0x1e] sm:$0x1] %vm175, %v985
    %1001 = vst.msk [vmem:[%s6 + $0x26] sm:$0x1] %vm175, %v986
    %1002 = vst.msk [vmem:[%s6 + $0x2e] sm:$0x1] %vm175, %v987
    %1003 = vst.msk [vmem:[%s6 + $0x36] sm:$0x1] %vm175, %v988
    %1004 = vst.msk [vmem:[%s6 + $0x3e] sm:$0x1] %vm175, %v989
    %v1005 = vld [vmem:[#allocation4 + $0x7] sm:$0x1]
    %v1006 = vld [vmem:[#allocation4 + $0xf] sm:$0x1]
    %v1007 = vld [vmem:[#allocation4 + $0x17] sm:$0x1]
    %v1008 = vld [vmem:[#allocation4 + $0x1f] sm:$0x1]
    %v1009 = vld [vmem:[#allocation4 + $0x27] sm:$0x1]
    %v1010 = vld [vmem:[#allocation4 + $0x2f] sm:$0x1]
    %v1011 = vld [vmem:[#allocation4 + $0x37] sm:$0x1]
    %v1012 = vld [vmem:[#allocation4 + $0x3f] sm:$0x1]
    %v1021 = vrot.slane %v1006, 7
    %v1022 = vsel %vm76, %v1021, %v1005
    %v1023 = vrot.slane %v1007, 6
    %v1024 = vsel %vm79, %v1023, %v1022
    %v1025 = vrot.slane %v1008, 5
    %v1026 = vsel %vm82, %v1025, %v1024
    %v1027 = vrot.slane %v1009, 4
    %v1028 = vsel %vm85, %v1027, %v1026
    %v1029 = vrot.slane %v1010, 3
    %v1030 = vsel %vm88, %v1029, %v1028
    %v1031 = vrot.slane %v1011, 2
    %v1032 = vsel %vm91, %v1031, %v1030
    %v1033 = vrot.slane %v1012, 1
    %v1034 = vsel %vm94, %v1033, %v1032
    %v1035 = vsel %vm96, %v1034, 0
    %1037 = vmatpush.msra.mxu0 0.0
    %1038 = vmatpush.msra.mxu0 0.0
    %1039 = vmatpush.msra.mxu0 0.0
    %1040 = vmatpush.msra.mxu0 0.0
    %1041 = vmatpush.msra.mxu0 0.0
    %1042 = vmatpush.msra.mxu0 0.0
    %1043 = vmatpush.msra.mxu0 0.0
    %1044 = vmatpush.msra.mxu0 0.0
    %1045 = vmatpush.msra.mxu0 0.0
    %1046 = vmatpush.msra.mxu0 0.0
    %1047 = vmatpush.msra.mxu0 0.0
    %1048 = vmatpush.msra.mxu0 0.0
    %1049 = vmatpush.msra.mxu0 0.0
    %1050 = vmatpush.msra.mxu0 0.0
    %1051 = vmatpush.msra.mxu0 %v47
    %1052 = vmatpush.msra.mxu0 %v46
    %1053 = vmatmul.f32.gmra.mxu0 %v1035
    %v1054 = vpop.f32.mrf.mxu0
    %v1055 = vadd.f32 %v65, %v1054
    %1056 = vdwg.mxu0
    %v1057 = vmul.f32 %v927, 0.9
    %v1058 = vadd.f32 %v1057, %v1055
    %v1059 = vsub.f32 %v1058, 1.0
    %v1060 = vsel %vm928, %v1059, %v1058
    %vm1061 = vcmp.gt.f32.partialorder %v1060, 1.0
    %v1062 = vsel %vm1061, 1.0, 0.0
    %v1064 = vsel %vm129, %v1062, 0
    %1066 = vmatpush.msra.mxu0 0.0
    %1067 = vmatpush.msra.mxu0 0.0
    %1068 = vmatpush.msra.mxu0 0.0
    %1069 = vmatpush.msra.mxu0 0.0
    %1070 = vmatpush.msra.mxu0 0.0
    %1071 = vmatpush.msra.mxu0 0.0
    %1072 = vmatpush.msra.mxu0 0.0
    %1073 = vmatpush.msra.mxu0 0.0
    %1074 = vmatpush.msra.mxu0 0.0
    %1075 = vmatpush.msra.mxu0 0.0
    %1076 = vmatpush.msra.mxu0 0.0
    %1077 = vmatpush.msra.mxu0 0.0
    %1078 = vmatpush.msra.mxu0 %v51
    %1079 = vmatpush.msra.mxu0 %v50
    %1080 = vmatpush.msra.mxu0 %v49
    %1081 = vmatpush.msra.mxu0 %v48
    %1082 = vmatmul.f32.gmra.mxu0 %v1064
    %v1083 = vpop.f32.mrf.mxu0
    %v1084 = vadd.f32 %v127, %v1083
    %1085 = vdwg.mxu0
    %v1086 = vmul.f32 %v956, 0.9
    %v1087 = vadd.f32 %v1086, %v1084
    %v1088 = vsub.f32 %v1087, 1.0
    %v1089 = vsel %vm957, %v1088, %v1087
    %vm1090 = vcmp.gt.f32.partialorder %v1089, 1.0
    %v1091 = vsel %vm1090, 1.0, 0.0
    %v1093 = vrot.slane %v1091, 1
    %v1094 = vrot.slane %v1091, 2
    %v1095 = vrot.slane %v1091, 3
    %v1096 = vrot.slane %v1091, 4
    %v1097 = vrot.slane %v1091, 5
    %v1098 = vrot.slane %v1091, 6
    %v1099 = vrot.slane %v1091, 7
    %1107 = vst.msk [vmem:[%s5 + $0x7] sm:$0x1] %vm175, %v1091
    %1108 = vst.msk [vmem:[%s5 + $0xf] sm:$0x1] %vm175, %v1093
    %1109 = vst.msk [vmem:[%s5 + $0x17] sm:$0x1] %vm175, %v1094
    %1110 = vst.msk [vmem:[%s5 + $0x1f] sm:$0x1] %vm175, %v1095
    %1111 = vst.msk [vmem:[%s5 + $0x27] sm:$0x1] %vm175, %v1096
    %1112 = vst.msk [vmem:[%s5 + $0x2f] sm:$0x1] %vm175, %v1097
    %1113 = vst.msk [vmem:[%s5 + $0x37] sm:$0x1] %vm175, %v1098
    %1114 = vst.msk [vmem:[%s5 + $0x3f] sm:$0x1] %vm175, %v1099
    %v1116 = vrot.slane %v1089, 1
    %v1117 = vrot.slane %v1089, 2
    %v1118 = vrot.slane %v1089, 3
    %v1119 = vrot.slane %v1089, 4
    %v1120 = vrot.slane %v1089, 5
    %v1121 = vrot.slane %v1089, 6
    %v1122 = vrot.slane %v1089, 7
    %1130 = vst.msk [vmem:[%s6 + $0x7] sm:$0x1] %vm175, %v1089
    %1131 = vst.msk [vmem:[%s6 + $0xf] sm:$0x1] %vm175, %v1116
    %1132 = vst.msk [vmem:[%s6 + $0x17] sm:$0x1] %vm175, %v1117
    %1133 = vst.msk [vmem:[%s6 + $0x1f] sm:$0x1] %vm175, %v1118
    %1134 = vst.msk [vmem:[%s6 + $0x27] sm:$0x1] %vm175, %v1119
    %1135 = vst.msk [vmem:[%s6 + $0x2f] sm:$0x1] %vm175, %v1120
    %1136 = vst.msk [vmem:[%s6 + $0x37] sm:$0x1] %vm175, %v1121
    %1137 = vst.msk [vmem:[%s6 + $0x3f] sm:$0x1] %vm175, %v1122
    %1138 = vst.msk [vmem:[#allocation2] sm:$0xff] %vm129, %v1060
    %vm1139 = vcmask 31744
    %1140 = vst.msk [vmem:[#allocation3] sm:$0xff] %vm1139, %v1089
    // Predicated region
    $region30: #{tpu_custom_call.1} parent=1 // pred_check
      _
    $region31: #{tpu_custom_call.1} parent=1 // pred_check_branch
      %1142 = sbr.rel (0) target = $region33
    $region32: #{tpu_custom_call.1} parent=1 // pred_region
      _
    $region33: #{tpu_custom_call.1} parent=1 // pred_fallthru
      _
    // Predicated region
    $region34: #{tpu_custom_call.1} parent=1 // pred_check
      _
    $region35: #{tpu_custom_call.1} parent=1 // pred_check_branch
      %1144 = sbr.rel (0) target = $region37
    $region36: #{tpu_custom_call.1} parent=1 // pred_region
      _
    $region37: #{tpu_custom_call.1} parent=1 // pred_fallthru
      _
    // Predicated region
    $region38: #{tpu_custom_call.1} parent=1 // pred_check
      _
    $region39: #{tpu_custom_call.1} parent=1 // pred_check_branch
      %1146 = sbr.rel (0) target = $region41
    $region40: #{tpu_custom_call.1} parent=1 // pred_region
      _
    $region41: #{tpu_custom_call.1} parent=1 // pred_fallthru
      _
    // Predicated region
    $region42: #{tpu_custom_call.1} parent=1 // pred_check
      _
    $region43: #{tpu_custom_call.1} parent=1 // pred_check_branch
      %1148 = sbr.rel (0) target = $region45
    $region44: #{tpu_custom_call.1} parent=1 // pred_region
      _
    $region45: #{tpu_custom_call.1} parent=1 // pred_fallthru
      _
    %1149 = vsyncpa [#allocation5], 1

</llo_original>
